<compile_context>
chip_gen: v7x
topology: tpu7x:2x2x1
jax: 0.10.0
libtpu: 0.0.40
codegen_flags: <defaults>
</compile_context>

<pallas_src>
import jax
import jax.numpy as jnp
from jax.experimental import pallas as pl
from jax.experimental.pallas import tpu as pltpu

_LANES = 128


def _round_up(x, m):
    return ((x + m - 1) // m) * m


def _vmem_capacity_bytes():
    try:
        cap = getattr(pltpu.get_tpu_info(), "vmem_capacity_bytes", None)
        if cap:
            return int(cap)
    except Exception:
        pass
    return 64 * 2**20  # conservative fallback: v7x per-TensorCore VMEM


def _choose_tiles(batch, feat, in_itemsize):
    """Pick (batch_tile tb, feature_tile td, vmem_capacity).

    tb, td are multiples of 128 (tb always; td unless it covers the full
    feature dim).  Sizing uses the lane-padded feature width so the VMEM
    footprint of narrow-D tiles is not underestimated.
    """
    feat_pad = _round_up(feat, _LANES)              # lane-padded width in VMEM
    vmem_cap = _vmem_capacity_bytes()
    # Budget for 2 inputs x 2 pipeline buffers; leave the rest of VMEM for
    # output buffers and compiler temporaries.
    input_budget = min(int(vmem_cap * 0.40), 48 * 2**20)
    row_bytes = 4 * feat_pad * in_itemsize          # 2 inputs x 2 buffers / row

    if _LANES * row_bytes <= input_budget:
        # Full feature dim per block; batch tile capped by bytes, not rows.
        td = feat
        tb = (input_budget // row_bytes) // _LANES * _LANES
    else:
        # Huge-D fallback: also tile the reduction axis.
        tb = _LANES
        td = (input_budget // (4 * _LANES * in_itemsize)) // _LANES * _LANES
        td = max(_LANES, min(td, feat_pad))
        if td >= feat:
            td = feat
    tb = max(_LANES, tb)
    # v7x megacore: keep >=2 batch blocks when there is enough work so the
    # "parallel" axis can be split across both TensorCores.
    if batch >= 2 * _LANES:
        tb = min(tb, max(_LANES, _round_up(pl.cdiv(batch, 2), _LANES)))
    tb = min(tb, _round_up(batch, _LANES))
    return tb, td, vmem_cap


def _make_kernel(tb, td, feat, nd):
    g = tb // _LANES
    need_mask = (nd > 1) and (feat % td != 0)       # ragged last D block

    def kernel(params_ref, za_ref, zb_ref, o_ref):
        # params_ref: (1, 2) f32 in SMEM -> [w, b] of nn.Linear(1, 1)
        # za_ref, zb_ref: (tb, td) tiles in VMEM
        # o_ref: (g, 128) lane-dense output block, resident across the D axis
        k = pl.program_id(1)

        # Elementwise path stays in the input dtype (bf16-friendly on v6e/v7x).
        diff = jnp.abs(za_ref[...] - zb_ref[...])                 # (tb, td)
        if need_mask:
            col = jax.lax.broadcasted_iota(jnp.int32, diff.shape, 1) + k * td
            diff = jnp.where(col < feat, diff, jnp.zeros_like(diff))

        # Free reshape (splits the sublane axis only), then f32-accumulated
        # lane reduction -> (g, 128) lane-dense partial distances.
        partial = jnp.sum(
            diff.reshape(g, _LANES, diff.shape[-1]).astype(jnp.float32),
            axis=-1,
        )

        @pl.when(k == 0)
        def _():
            o_ref[...] = partial

        @pl.when(k > 0)
        def _():
            o_ref[...] += partial

        @pl.when(k == nd - 1)
        def _():
            w = params_ref[0, 0]
            b = params_ref[0, 1]
            o_ref[...] = o_ref[...] * w + b

    return kernel


def manhattan_class_head(z_a, z_b, weight, bias):
    """z_a, z_b: (B, D) (f32 or bf16). weight, bias: scalars of nn.Linear(1,1)."""
    B, D = z_a.shape
    assert z_b.shape == (B, D)
    in_itemsize = jnp.dtype(z_a.dtype).itemsize

    params = jnp.concatenate(
        [jnp.asarray(weight, jnp.float32).reshape(1),
         jnp.asarray(bias, jnp.float32).reshape(1)]
    ).reshape(1, 2)

    tb, td, vmem_cap = _choose_tiles(B, D, in_itemsize)
    nb = pl.cdiv(B, tb)
    nd = pl.cdiv(D, td)
    g = tb // _LANES

    # Explicit VMEM limit: double-buffered inputs (lane-padded) + output + slack.
    td_lanes = _round_up(td, _LANES)
    used = 4 * tb * td_lanes * in_itemsize + 2 * tb * 4
    vmem_limit = int(min(vmem_cap - 4 * 2**20, used + 16 * 2**20))
    vmem_limit = max(vmem_limit, used + 2 * 2**20)

    cost = pl.CostEstimate(
        flops=3 * B * D,
        transcendentals=0,
        bytes_accessed=2 * B * D * in_itemsize + 4 * B,
    )

    out = pl.pallas_call(
        _make_kernel(tb, td, D, nd),
        out_shape=jax.ShapeDtypeStruct((nb * g, _LANES), jnp.float32),
        grid=(nb, nd),
        in_specs=[
            pl.BlockSpec(memory_space=pltpu.MemorySpace.SMEM),     # [w, b]
            pl.BlockSpec((tb, td), lambda i, k: (i, k)),           # z_a tile
            pl.BlockSpec((tb, td), lambda i, k: (i, k)),           # z_b tile
        ],
        out_specs=pl.BlockSpec((g, _LANES), lambda i, k: (i, 0)),
        compiler_params=pltpu.CompilerParams(
            dimension_semantics=("parallel", "arbitrary"),
            vmem_limit_bytes=vmem_limit,
        ),
        cost_estimate=cost,
    )(params, z_a, z_b)

    # Lane-dense (nb*g, 128) slab -> (B, 1); padded tail rows are sliced off.
    return out.reshape(-1)[:B].reshape(B, 1)


if __name__ == "__main__":
    key = jax.random.PRNGKey(0)
    k_a, k_b, k_w, k_bias = jax.random.split(key, 4)

    B, D = 8, 32                      # batch=8, hidden=32
    z_a = jax.random.normal(k_a, (B, D), dtype=jnp.float32)
    z_b = jax.random.normal(k_b, (B, D), dtype=jnp.float32)

    # Deterministic init of the nn.Linear(1, 1) parameters
    weight = jax.random.normal(k_w, (), dtype=jnp.float32)
    bias = jax.random.normal(k_bias, (), dtype=jnp.float32)

    y_logit = manhattan_class_head(z_a, z_b, weight, bias)
    y_logit = jax.block_until_ready(y_logit)

    # Reference check in plain JAX
    ref = jnp.sum(jnp.abs(z_a - z_b), axis=1, keepdims=True) * weight + bias
    assert y_logit.shape == (B, 1)
    assert jnp.allclose(y_logit, ref, atol=1e-5, rtol=1e-5)

    print("KERNEL_OK")
</pallas_src>

<mosaic_0001>
module attributes {stable_mosaic.version = 11 : i64} {
  func.func @kernel(%arg0: i32, %arg1: i32, %arg2: memref<1x2xf32, #tpu.memory_space<smem>>, %arg3: memref<128x32xf32, #tpu.memory_space<vmem>>, %arg4: memref<128x32xf32, #tpu.memory_space<vmem>>, %arg5: memref<1x128xf32, #tpu.memory_space<vmem>>) attributes {dimension_semantics = [#tpu.dimension_semantics<parallel>, #tpu.dimension_semantics<arbitrary>], iteration_bounds = array<i64: 1, 1>, scalar_prefetch = 0 : i64, scratch_operands = 0 : i64, tpu.core_type = #tpu.core_type<tc>, window_params = [{transform_indices = @transform_0, window_bounds = array<i64: 1, 2>}, {transform_indices = @transform_1, window_bounds = array<i64: 128, 32>}, {transform_indices = @transform_2, window_bounds = array<i64: 128, 32>}, {transform_indices = @transform_3, window_bounds = array<i64: 1, 128>}]} {
    %c0 = arith.constant 0 : index
    %c0_0 = arith.constant 0 : index
    %0 = vector.load %arg3[%c0, %c0_0] : memref<128x32xf32, #tpu.memory_space<vmem>>, vector<128x32xf32>
    %c0_1 = arith.constant 0 : index
    %c0_2 = arith.constant 0 : index
    %1 = vector.load %arg4[%c0_1, %c0_2] : memref<128x32xf32, #tpu.memory_space<vmem>>, vector<128x32xf32>
    %2 = arith.subf %0, %1 : vector<128x32xf32>
    %3 = math.absf %2 : vector<128x32xf32>
    %4 = vector.shape_cast %3 : vector<128x32xf32> to vector<1x128x32xf32>
    %cst = arith.constant dense<0.000000e+00> : vector<1x128xf32>
    %5 = vector.multi_reduction <add>, %4, %cst [2] : vector<1x128x32xf32> to vector<1x128xf32>
    %c0_i32 = arith.constant 0 : i32
    %6 = arith.cmpi eq, %arg1, %c0_i32 : i32
    %7 = arith.extui %6 : i1 to i32
    %c0_i32_3 = arith.constant 0 : i32
    %8 = arith.cmpi ne, %7, %c0_i32_3 : i32
    scf.if %8 {
      %c0_8 = arith.constant 0 : index
      %c0_9 = arith.constant 0 : index
      %15 = vector.load %arg5[%c0_8, %c0_9] : memref<1x128xf32, #tpu.memory_space<vmem>>, vector<1x128xf32>
      tpu.vector_store %arg5[%c0_8, %c0_9], %5 {strides = array<i32>} : memref<1x128xf32, #tpu.memory_space<vmem>>, vector<1x128xf32>,
    } else {
    }
    %c0_i32_4 = arith.constant 0 : i32
    %9 = arith.cmpi sgt, %arg1, %c0_i32_4 : i32
    %10 = arith.extui %9 : i1 to i32
    %c0_i32_5 = arith.constant 0 : i32
    %11 = arith.cmpi ne, %10, %c0_i32_5 : i32
    scf.if %11 {
      %c0_8 = arith.constant 0 : index
      %c0_9 = arith.constant 0 : index
      %15 = vector.load %arg5[%c0_8, %c0_9] : memref<1x128xf32, #tpu.memory_space<vmem>>, vector<1x128xf32>
      %16 = arith.addf %15, %5 : vector<1x128xf32>
      %c0_10 = arith.constant 0 : index
      %c0_11 = arith.constant 0 : index
      %17 = vector.load %arg5[%c0_10, %c0_11] : memref<1x128xf32, #tpu.memory_space<vmem>>, vector<1x128xf32>
      tpu.vector_store %arg5[%c0_10, %c0_11], %16 {strides = array<i32>} : memref<1x128xf32, #tpu.memory_space<vmem>>, vector<1x128xf32>,
    } else {
    }
    %c0_i32_6 = arith.constant 0 : i32
    %12 = arith.cmpi eq, %arg1, %c0_i32_6 : i32
    %13 = arith.extui %12 : i1 to i32
    %c0_i32_7 = arith.constant 0 : i32
    %14 = arith.cmpi ne, %13, %c0_i32_7 : i32
    scf.if %14 {
      %c0_8 = arith.constant 0 : index
      %c0_9 = arith.constant 0 : index
      %15 = memref.load %arg2[%c0_8, %c0_9] : memref<1x2xf32, #tpu.memory_space<smem>>
      %c0_10 = arith.constant 0 : index
      %c1 = arith.constant 1 : index
      %16 = memref.load %arg2[%c0_10, %c1] : memref<1x2xf32, #tpu.memory_space<smem>>
      %c0_11 = arith.constant 0 : index
      %c0_12 = arith.constant 0 : index
      %17 = vector.load %arg5[%c0_11, %c0_12] : memref<1x128xf32, #tpu.memory_space<vmem>>, vector<1x128xf32>
      %18 = vector.broadcast %15 : f32 to vector<1x128xf32>
      %19 = arith.mulf %17, %18 : vector<1x128xf32>
      %20 = vector.broadcast %16 : f32 to vector<1x128xf32>
      %21 = arith.addf %19, %20 : vector<1x128xf32>
      %c0_13 = arith.constant 0 : index
      %c0_14 = arith.constant 0 : index
      %22 = vector.load %arg5[%c0_13, %c0_14] : memref<1x128xf32, #tpu.memory_space<vmem>>, vector<1x128xf32>
      tpu.vector_store %arg5[%c0_13, %c0_14], %21 {strides = array<i32>} : memref<1x128xf32, #tpu.memory_space<vmem>>, vector<1x128xf32>,
    } else {
    }
    return
  }
  func.func @transform_0(%arg0: i32, %arg1: i32) -> (i32, i32) {
    %c0_i32 = arith.constant 0 : i32
    %c0_i32_0 = arith.constant 0 : i32
    %c0_i32_1 = arith.constant 0 : i32
    return %c0_i32, %c0_i32_0 : i32, i32
  }
  func.func @transform_1(%arg0: i32, %arg1: i32) -> (i32, i32) {
    %c0_i32 = arith.constant 0 : i32
    return %arg0, %arg1 : i32, i32
  }
  func.func @transform_2(%arg0: i32, %arg1: i32) -> (i32, i32) {
    %c0_i32 = arith.constant 0 : i32
    return %arg0, %arg1 : i32, i32
  }
  func.func @transform_3(%arg0: i32, %arg1: i32) -> (i32, i32) {
    %c0_i32 = arith.constant 0 : i32
    %c0_i32_0 = arith.constant 0 : i32
    return %arg0, %c0_i32 : i32, i32
  }
}

</mosaic_0001>

<llo_original>
// kernel: tpu_custom_call.1
$region0: #{tpu_custom_call.1}
  #allocation0 [shape = 'u32[]', space=smem, size = 0x4, offset = 0x4, fixed_abs, tag = 'smem constant byte address 0x4 - core index']
  #allocation1 [shape = 'u32[144,128]{1,0:T(1,128)}', space=vmem, size = 0x12000, scoped, tag = 'internal scratch']
  %s0 = inlined_call_operand.hbm [shape: f32[1,2], index: 0, kind: input, shape index: {}]
  %s1 = inlined_call_operand.hbm [shape: f32[8,32], index: 1, kind: input, shape index: {}]
  %s2 = inlined_call_operand.hbm [shape: f32[8,32], index: 2, kind: input, shape index: {}]
  %s3 = inlined_call_operand.hbm [shape: f32[1,128], index: 3, kind: output, shape index: {}]
  %s4 = sld [smem:[#allocation0]]
  $region46: #{tpu_custom_call.1} parent=0
    _
  %s6 = ssub.s32 1, %s4
  %s7 = scalar_select 0, %s6, %s4
  $region1: #{tpu_custom_call.1} parent=0
    #allocation2 [shape = 'u8[512]{0}', space=smem, size = 0x200, scoped, tag = 'input window, operand 0, single buffered']
    #allocation3 [shape = 's32[1]{0}', space=sflag, size = 0x4, scoped, tag = 'scoped memory for tpu_custom_call.1']
    #allocation4 [shape = 's32[1]{0}', space=sflag, size = 0x4, scoped, tag = 'scoped memory for tpu_custom_call.1']
    #allocation5 [shape = 's32[1]{0}', space=sflag, size = 0x4, scoped, tag = 'scoped memory for tpu_custom_call.1']
    #allocation6 [shape = 'u8[65536]{0}', space=vmem, size = 0x10000, scoped, tag = 'input window, operand 1, single buffered']
    #allocation7 [shape = 'u8[65536]{0}', space=vmem, size = 0x10000, scoped, tag = 'input window, operand 2, single buffered']
    #allocation8 [shape = 's32[1]{0}', space=sflag, size = 0x4, scoped, tag = 'scoped memory for tpu_custom_call.1']
    #allocation9 [shape = 'u8[512]{0}', space=vmem, size = 0x400, scoped, tag = 'output window, operand 0, single buffered']
    %8 = vsyncpa [#allocation5], 0
    %9 = vsyncpa [#allocation3], 0
    %10 = vsyncpa [#allocation8], 0
    %11 = vsyncpa [#allocation4], 0
    // Predicated region
    $region2: #{tpu_custom_call.1} parent=1 // pred_check
      _
    $region3: #{tpu_custom_call.1} parent=1 // pred_check_branch
      %13 = sbr.rel (0) target = $region5
    $region4: #{tpu_custom_call.1} parent=1 // pred_region
      %s15 = ssub.s32 16, 16
      %16 = vsyncadd [#allocation5], %s15
      %19 = dma.hbm_to_smem %s0, 16, [#allocation2], [#allocation5]
    $region5: #{tpu_custom_call.1} parent=1 // pred_fallthru
      _
    // Predicated region
    $region6: #{tpu_custom_call.1} parent=1 // pred_check
      _
    $region7: #{tpu_custom_call.1} parent=1 // pred_check_branch
      %21 = sbr.rel (0) target = $region9
    $region8: #{tpu_custom_call.1} parent=1 // pred_region
      %s23 = ssub.s32 2048, 128
      %24 = vsyncadd [#allocation3], %s23
      %s25 = sshll.u32 [#allocation6], 4
      %s26 = int_to_ptr.vmem [resolvable:$true] %s25
      %31 = dma.hbm_to_vmem [thread:$0]  %s1, 128, %s26, [#allocation3], 128, 128, 8
    $region9: #{tpu_custom_call.1} parent=1 // pred_fallthru
      _
    // Predicated region
    $region10: #{tpu_custom_call.1} parent=1 // pred_check
      _
    $region11: #{tpu_custom_call.1} parent=1 // pred_check_branch
      %33 = sbr.rel (0) target = $region13
    $region12: #{tpu_custom_call.1} parent=1 // pred_region
      %s35 = ssub.s32 2048, 128
      %36 = vsyncadd [#allocation8], %s35
      %s37 = sshll.u32 [#allocation7], 4
      %s38 = int_to_ptr.vmem [resolvable:$true] %s37
      %43 = dma.hbm_to_vmem [thread:$0]  %s2, 128, %s38, [#allocation8], 128, 128, 8
    $region13: #{tpu_custom_call.1} parent=1 // pred_fallthru
      _
    // Predicated region
    $region14: #{tpu_custom_call.1} parent=1 // pred_check
      _
    $region15: #{tpu_custom_call.1} parent=1 // pred_check_branch
      %45 = sbr.rel (0) target = $region17
    $region16: #{tpu_custom_call.1} parent=1 // pred_region
      %46 = dma.done [#allocation5], 16
    $region17: #{tpu_custom_call.1} parent=1 // pred_fallthru
      _
    // Predicated region
    $region18: #{tpu_custom_call.1} parent=1 // pred_check
      _
    $region19: #{tpu_custom_call.1} parent=1 // pred_check_branch
      %48 = sbr.rel (0) target = $region21
    $region20: #{tpu_custom_call.1} parent=1 // pred_region
      %49 = dma.done [#allocation3], 2048
    $region21: #{tpu_custom_call.1} parent=1 // pred_fallthru
      _
    // Predicated region
    $region22: #{tpu_custom_call.1} parent=1 // pred_check
      _
    $region23: #{tpu_custom_call.1} parent=1 // pred_check_branch
      %51 = sbr.rel (0) target = $region25
    $region24: #{tpu_custom_call.1} parent=1 // pred_region
      %52 = dma.done [#allocation8], 2048
    $region25: #{tpu_custom_call.1} parent=1 // pred_fallthru
      _
    %53 = sfence
    %v54 = vld [vmem:[#allocation6] sm:$0xff]
    %v55 = vld [vmem:[#allocation6 + $0x8] sm:$0xff]
    %v56 = vld [vmem:[#allocation6 + $0x10] sm:$0xff]
    %v57 = vld [vmem:[#allocation6 + $0x18] sm:$0xff]
    %v58 = vld [vmem:[#allocation6 + $0x20] sm:$0xff]
    %v59 = vld [vmem:[#allocation6 + $0x28] sm:$0xff]
    %v60 = vld [vmem:[#allocation6 + $0x30] sm:$0xff]
    %v61 = vld [vmem:[#allocation6 + $0x38] sm:$0xff]
    %v62 = vld [vmem:[#allocation6 + $0x40] sm:$0xff]
    %v63 = vld [vmem:[#allocation6 + $0x48] sm:$0xff]
    %v64 = vld [vmem:[#allocation6 + $0x50] sm:$0xff]
    %v65 = vld [vmem:[#allocation6 + $0x58] sm:$0xff]
    %v66 = vld [vmem:[#allocation6 + $0x60] sm:$0xff]
    %v67 = vld [vmem:[#allocation6 + $0x68] sm:$0xff]
    %v68 = vld [vmem:[#allocation6 + $0x70] sm:$0xff]
    %v69 = vld [vmem:[#allocation6 + $0x78] sm:$0xff]
    %v70 = vld [vmem:[#allocation7] sm:$0xff]
    %v71 = vld [vmem:[#allocation7 + $0x8] sm:$0xff]
    %v72 = vld [vmem:[#allocation7 + $0x10] sm:$0xff]
    %v73 = vld [vmem:[#allocation7 + $0x18] sm:$0xff]
    %v74 = vld [vmem:[#allocation7 + $0x20] sm:$0xff]
    %v75 = vld [vmem:[#allocation7 + $0x28] sm:$0xff]
    %v76 = vld [vmem:[#allocation7 + $0x30] sm:$0xff]
    %v77 = vld [vmem:[#allocation7 + $0x38] sm:$0xff]
    %v78 = vld [vmem:[#allocation7 + $0x40] sm:$0xff]
    %v79 = vld [vmem:[#allocation7 + $0x48] sm:$0xff]
    %v80 = vld [vmem:[#allocation7 + $0x50] sm:$0xff]
    %v81 = vld [vmem:[#allocation7 + $0x58] sm:$0xff]
    %v82 = vld [vmem:[#allocation7 + $0x60] sm:$0xff]
    %v83 = vld [vmem:[#allocation7 + $0x68] sm:$0xff]
    %v84 = vld [vmem:[#allocation7 + $0x70] sm:$0xff]
    %v85 = vld [vmem:[#allocation7 + $0x78] sm:$0xff]
    %v86 = vsub.f32 %v54, %v70
    %v87 = vsub.f32 %v55, %v71
    %v88 = vsub.f32 %v56, %v72
    %v89 = vsub.f32 %v57, %v73
    %v90 = vsub.f32 %v58, %v74
    %v91 = vsub.f32 %v59, %v75
    %v92 = vsub.f32 %v60, %v76
    %v93 = vsub.f32 %v61, %v77
    %v94 = vsub.f32 %v62, %v78
    %v95 = vsub.f32 %v63, %v79
    %v96 = vsub.f32 %v64, %v80
    %v97 = vsub.f32 %v65, %v81
    %v98 = vsub.f32 %v66, %v82
    %v99 = vsub.f32 %v67, %v83
    %v100 = vsub.f32 %v68, %v84
    %v101 = vsub.f32 %v69, %v85
    %v102 = vand.u32 2147483647, %v86
    %v103 = vand.u32 2147483647, %v87
    %v104 = vand.u32 2147483647, %v88
    %v105 = vand.u32 2147483647, %v89
    %v106 = vand.u32 2147483647, %v90
    %v107 = vand.u32 2147483647, %v91
    %v108 = vand.u32 2147483647, %v92
    %v109 = vand.u32 2147483647, %v93
    %v110 = vand.u32 2147483647, %v94
    %v111 = vand.u32 2147483647, %v95
    %v112 = vand.u32 2147483647, %v96
    %v113 = vand.u32 2147483647, %v97
    %v114 = vand.u32 2147483647, %v98
    %v115 = vand.u32 2147483647, %v99
    %v116 = vand.u32 2147483647, %v100
    %v117 = vand.u32 2147483647, %v101
    %vm118 = vcmask 261120
    %v119 = vsel %vm118, %v102, 0.0
    %120 = vadd.xlane.f32.xlu0 %v119
    %v121 = vpop.xlane.xlu0 %120
    %v122 = vsel %vm118, %v103, 0.0
    %123 = vadd.xlane.f32.xlu0 %v122
    %v124 = vpop.xlane.xlu0 %123
    %v125 = vsel %vm118, %v104, 0.0
    %126 = vadd.xlane.f32.xlu0 %v125
    %v127 = vpop.xlane.xlu0 %126
    %v128 = vsel %vm118, %v105, 0.0
    %129 = vadd.xlane.f32.xlu0 %v128
    %v130 = vpop.xlane.xlu0 %129
    %v131 = vsel %vm118, %v106, 0.0
    %132 = vadd.xlane.f32.xlu0 %v131
    %v133 = vpop.xlane.xlu0 %132
    %v134 = vsel %vm118, %v107, 0.0
    %135 = vadd.xlane.f32.xlu0 %v134
    %v136 = vpop.xlane.xlu0 %135
    %v137 = vsel %vm118, %v108, 0.0
    %138 = vadd.xlane.f32.xlu0 %v137
    %v139 = vpop.xlane.xlu0 %138
    %v140 = vsel %vm118, %v109, 0.0
    %141 = vadd.xlane.f32.xlu0 %v140
    %v142 = vpop.xlane.xlu0 %141
    %v143 = vsel %vm118, %v110, 0.0
    %144 = vadd.xlane.f32.xlu0 %v143
    %v145 = vpop.xlane.xlu0 %144
    %v146 = vsel %vm118, %v111, 0.0
    %147 = vadd.xlane.f32.xlu0 %v146
    %v148 = vpop.xlane.xlu0 %147
    %v149 = vsel %vm118, %v112, 0.0
    %150 = vadd.xlane.f32.xlu0 %v149
    %v151 = vpop.xlane.xlu0 %150
    %v152 = vsel %vm118, %v113, 0.0
    %153 = vadd.xlane.f32.xlu0 %v152
    %v154 = vpop.xlane.xlu0 %153
    %v155 = vsel %vm118, %v114, 0.0
    %156 = vadd.xlane.f32.xlu0 %v155
    %v157 = vpop.xlane.xlu0 %156
    %v158 = vsel %vm118, %v115, 0.0
    %159 = vadd.xlane.f32.xlu0 %v158
    %v160 = vpop.xlane.xlu0 %159
    %v161 = vsel %vm118, %v116, 0.0
    %162 = vadd.xlane.f32.xlu0 %v161
    %v163 = vpop.xlane.xlu0 %162
    %v164 = vsel %vm118, %v117, 0.0
    %165 = vadd.xlane.f32.xlu0 %v164
    %v166 = vpop.xlane.xlu0 %165
    %p167 = scmp.eq.s32.totalorder 0, 0
    // Predicated region
    $region26: #{tpu_custom_call.1} parent=1 // pred_check
      %p168 = pneg %p167
    $region27: #{tpu_custom_call.1} parent=1 // pred_check_branch
      %170 = sbr.rel (%p168) target = $region29
    $region28: #{tpu_custom_call.1} parent=1 // pred_region
      %v187 = vlaneseq
      %v188 = vand.u32 %v187, 127
      %v189 = vlaneseq
      %v190 = vshrl.u32 %v189, 7
      %v191 = vsub.s32 %v188, %v190
      %v192 = vrot.slane %v121, %v191
      %v193 = vadd.s32 %v188, 4294967288
      %v194 = vlaneseq
      %v195 = vshrl.u32 %v194, 7
      %v196 = vsub.s32 %v193, %v195
      %v197 = vrot.slane %v124, %v196
      %vm198 = vcmask 130112
      %v199 = vsel %vm198, %v197, %v192
      %v200 = vadd.s32 %v188, 4294967280
      %v201 = vlaneseq
      %v202 = vshrl.u32 %v201, 7
      %v203 = vsub.s32 %v200, %v202
      %v204 = vrot.slane %v127, %v203
      %vm205 = vcmask 195712
      %v206 = vsel %vm205, %v204, %v199
      %v207 = vadd.s32 %v188, 4294967272
      %v208 = vlaneseq
      %v209 = vshrl.u32 %v208, 7
      %v210 = vsub.s32 %v207, %v209
      %v211 = vrot.slane %v130, %v210
      %vm212 = vcmask 261312
      %v213 = vsel %vm212, %v211, %v206
      %v214 = vadd.s32 %v188, 4294967264
      %v215 = vlaneseq
      %v216 = vshrl.u32 %v215, 7
      %v217 = vsub.s32 %v214, %v216
      %v218 = vrot.slane %v133, %v217
      %vm219 = vcmask 326912
      %v220 = vsel %vm219, %v218, %v213
      %v221 = vadd.s32 %v188, 4294967256
      %v222 = vlaneseq
      %v223 = vshrl.u32 %v222, 7
      %v224 = vsub.s32 %v221, %v223
      %v225 = vrot.slane %v136, %v224
      %vm226 = vcmask 392512
      %v227 = vsel %vm226, %v225, %v220
      %v228 = vadd.s32 %v188, 4294967248
      %v229 = vlaneseq
      %v230 = vshrl.u32 %v229, 7
      %v231 = vsub.s32 %v228, %v230
      %v232 = vrot.slane %v139, %v231
      %vm233 = vcmask 458112
      %v234 = vsel %vm233, %v232, %v227
      %v235 = vadd.s32 %v188, 4294967240
      %v236 = vlaneseq
      %v237 = vshrl.u32 %v236, 7
      %v238 = vsub.s32 %v235, %v237
      %v239 = vrot.slane %v142, %v238
      %vm240 = vcmask 523712
      %v241 = vsel %vm240, %v239, %v234
      %v242 = vadd.s32 %v188, 4294967232
      %v243 = vlaneseq
      %v244 = vshrl.u32 %v243, 7
      %v245 = vsub.s32 %v242, %v244
      %v246 = vrot.slane %v145, %v245
      %vm247 = vcmask 589312
      %v248 = vsel %vm247, %v246, %v241
      %v249 = vadd.s32 %v188, 4294967224
      %v250 = vlaneseq
      %v251 = vshrl.u32 %v250, 7
      %v252 = vsub.s32 %v249, %v251
      %v253 = vrot.slane %v148, %v252
      %vm254 = vcmask 654912
      %v255 = vsel %vm254, %v253, %v248
      %v256 = vadd.s32 %v188, 4294967216
      %v257 = vlaneseq
      %v258 = vshrl.u32 %v257, 7
      %v259 = vsub.s32 %v256, %v258
      %v260 = vrot.slane %v151, %v259
      %vm261 = vcmask 720512
      %v262 = vsel %vm261, %v260, %v255
      %v263 = vadd.s32 %v188, 4294967208
      %v264 = vlaneseq
      %v265 = vshrl.u32 %v264, 7
      %v266 = vsub.s32 %v263, %v265
      %v267 = vrot.slane %v154, %v266
      %vm268 = vcmask 786112
      %v269 = vsel %vm268, %v267, %v262
      %v270 = vadd.s32 %v188, 4294967200
      %v271 = vlaneseq
      %v272 = vshrl.u32 %v271, 7
      %v273 = vsub.s32 %v270, %v272
      %v274 = vrot.slane %v157, %v273
      %vm275 = vcmask 851712
      %v276 = vsel %vm275, %v274, %v269
      %v277 = vadd.s32 %v188, 4294967192
      %v278 = vlaneseq
      %v279 = vshrl.u32 %v278, 7
      %v280 = vsub.s32 %v277, %v279
      %v281 = vrot.slane %v160, %v280
      %vm282 = vcmask 917312
      %v283 = vsel %vm282, %v281, %v276
      %v284 = vadd.s32 %v188, 4294967184
      %v285 = vlaneseq
      %v286 = vshrl.u32 %v285, 7
      %v287 = vsub.s32 %v284, %v286
      %v288 = vrot.slane %v163, %v287
      %vm289 = vcmask 982912
      %v290 = vsel %vm289, %v288, %v283
      %v291 = vadd.s32 %v188, 4294967176
      %v292 = vlaneseq
      %v293 = vshrl.u32 %v292, 7
      %v294 = vsub.s32 %v291, %v293
      %v295 = vrot.slane %v166, %v294
      %vm296 = vcmask 1048512
      %v297 = vsel %vm296, %v295, %v290
      %299 = vst [vmem:[#allocation9] sm:$0x1] %v297
    $region29: #{tpu_custom_call.1} parent=1 // pred_fallthru
      _
    %p300 = scmp.gt.s32.totalorder 0, 0
    // Predicated region
    $region30: #{tpu_custom_call.1} parent=1 // pred_check
      %p301 = pneg %p300
    $region31: #{tpu_custom_call.1} parent=1 // pred_check_branch
      %303 = sbr.rel (%p301) target = $region33
    $region32: #{tpu_custom_call.1} parent=1 // pred_region
      %v304 = vld [vmem:[#allocation9] sm:$0x1]
      %v321 = vlaneseq
      %v322 = vshrl.u32 %v321, 7
      %v323 = vsub.s32 0, %v322
      %v324 = vrot.slane %v121, %v323
      %v325 = vlaneseq
      %v326 = vshrl.u32 %v325, 7
      %v327 = vsub.s32 1, %v326
      %v328 = vrot.slane %v121, %v327
      %v329 = vlaneseq
      %v330 = vshrl.u32 %v329, 7
      %v331 = vsub.s32 2, %v330
      %v332 = vrot.slane %v121, %v331
      %v333 = vlaneseq
      %v334 = vshrl.u32 %v333, 7
      %v335 = vsub.s32 3, %v334
      %v336 = vrot.slane %v121, %v335
      %v337 = vlaneseq
      %v338 = vshrl.u32 %v337, 7
      %v339 = vsub.s32 4, %v338
      %v340 = vrot.slane %v121, %v339
      %v341 = vlaneseq
      %v342 = vshrl.u32 %v341, 7
      %v343 = vsub.s32 5, %v342
      %v344 = vrot.slane %v121, %v343
      %v345 = vlaneseq
      %v346 = vshrl.u32 %v345, 7
      %v347 = vsub.s32 6, %v346
      %v348 = vrot.slane %v121, %v347
      %v349 = vlaneseq
      %v350 = vshrl.u32 %v349, 7
      %v351 = vsub.s32 7, %v350
      %v352 = vrot.slane %v121, %v351
      %v353 = vlaneseq
      %v354 = vshrl.u32 %v353, 7
      %v355 = vsub.s32 0, %v354
      %v356 = vrot.slane %v124, %v355
      %v357 = vlaneseq
      %v358 = vshrl.u32 %v357, 7
      %v359 = vsub.s32 1, %v358
      %v360 = vrot.slane %v124, %v359
      %v361 = vlaneseq
      %v362 = vshrl.u32 %v361, 7
      %v363 = vsub.s32 2, %v362
      %v364 = vrot.slane %v124, %v363
      %v365 = vlaneseq
      %v366 = vshrl.u32 %v365, 7
      %v367 = vsub.s32 3, %v366
      %v368 = vrot.slane %v124, %v367
      %v369 = vlaneseq
      %v370 = vshrl.u32 %v369, 7
      %v371 = vsub.s32 4, %v370
      %v372 = vrot.slane %v124, %v371
      %v373 = vlaneseq
      %v374 = vshrl.u32 %v373, 7
      %v375 = vsub.s32 5, %v374
      %v376 = vrot.slane %v124, %v375
      %v377 = vlaneseq
      %v378 = vshrl.u32 %v377, 7
      %v379 = vsub.s32 6, %v378
      %v380 = vrot.slane %v124, %v379
      %v381 = vlaneseq
      %v382 = vshrl.u32 %v381, 7
      %v383 = vsub.s32 7, %v382
      %v384 = vrot.slane %v124, %v383
      %v385 = vlaneseq
      %v386 = vshrl.u32 %v385, 7
      %v387 = vsub.s32 0, %v386
      %v388 = vrot.slane %v127, %v387
      %v389 = vlaneseq
      %v390 = vshrl.u32 %v389, 7
      %v391 = vsub.s32 1, %v390
      %v392 = vrot.slane %v127, %v391
      %v393 = vlaneseq
      %v394 = vshrl.u32 %v393, 7
      %v395 = vsub.s32 2, %v394
      %v396 = vrot.slane %v127, %v395
      %v397 = vlaneseq
      %v398 = vshrl.u32 %v397, 7
      %v399 = vsub.s32 3, %v398
      %v400 = vrot.slane %v127, %v399
      %v401 = vlaneseq
      %v402 = vshrl.u32 %v401, 7
      %v403 = vsub.s32 4, %v402
      %v404 = vrot.slane %v127, %v403
      %v405 = vlaneseq
      %v406 = vshrl.u32 %v405, 7
      %v407 = vsub.s32 5, %v406
      %v408 = vrot.slane %v127, %v407
      %v409 = vlaneseq
      %v410 = vshrl.u32 %v409, 7
      %v411 = vsub.s32 6, %v410
      %v412 = vrot.slane %v127, %v411
      %v413 = vlaneseq
      %v414 = vshrl.u32 %v413, 7
      %v415 = vsub.s32 7, %v414
      %v416 = vrot.slane %v127, %v415
      %v417 = vlaneseq
      %v418 = vshrl.u32 %v417, 7
      %v419 = vsub.s32 0, %v418
      %v420 = vrot.slane %v130, %v419
      %v421 = vlaneseq
      %v422 = vshrl.u32 %v421, 7
      %v423 = vsub.s32 1, %v422
      %v424 = vrot.slane %v130, %v423
      %v425 = vlaneseq
      %v426 = vshrl.u32 %v425, 7
      %v427 = vsub.s32 2, %v426
      %v428 = vrot.slane %v130, %v427
      %v429 = vlaneseq
      %v430 = vshrl.u32 %v429, 7
      %v431 = vsub.s32 3, %v430
      %v432 = vrot.slane %v130, %v431
      %v433 = vlaneseq
      %v434 = vshrl.u32 %v433, 7
      %v435 = vsub.s32 4, %v434
      %v436 = vrot.slane %v130, %v435
      %v437 = vlaneseq
      %v438 = vshrl.u32 %v437, 7
      %v439 = vsub.s32 5, %v438
      %v440 = vrot.slane %v130, %v439
      %v441 = vlaneseq
      %v442 = vshrl.u32 %v441, 7
      %v443 = vsub.s32 6, %v442
      %v444 = vrot.slane %v130, %v443
      %v445 = vlaneseq
      %v446 = vshrl.u32 %v445, 7
      %v447 = vsub.s32 7, %v446
      %v448 = vrot.slane %v130, %v447
      %v449 = vlaneseq
      %v450 = vshrl.u32 %v449, 7
      %v451 = vsub.s32 0, %v450
      %v452 = vrot.slane %v133, %v451
      %v453 = vlaneseq
      %v454 = vshrl.u32 %v453, 7
      %v455 = vsub.s32 1, %v454
      %v456 = vrot.slane %v133, %v455
      %v457 = vlaneseq
      %v458 = vshrl.u32 %v457, 7
      %v459 = vsub.s32 2, %v458
      %v460 = vrot.slane %v133, %v459
      %v461 = vlaneseq
      %v462 = vshrl.u32 %v461, 7
      %v463 = vsub.s32 3, %v462
      %v464 = vrot.slane %v133, %v463
      %v465 = vlaneseq
      %v466 = vshrl.u32 %v465, 7
      %v467 = vsub.s32 4, %v466
      %v468 = vrot.slane %v133, %v467
      %v469 = vlaneseq
      %v470 = vshrl.u32 %v469, 7
      %v471 = vsub.s32 5, %v470
      %v472 = vrot.slane %v133, %v471
      %v473 = vlaneseq
      %v474 = vshrl.u32 %v473, 7
      %v475 = vsub.s32 6, %v474
      %v476 = vrot.slane %v133, %v475
      %v477 = vlaneseq
      %v478 = vshrl.u32 %v477, 7
      %v479 = vsub.s32 7, %v478
      %v480 = vrot.slane %v133, %v479
      %v481 = vlaneseq
      %v482 = vshrl.u32 %v481, 7
      %v483 = vsub.s32 0, %v482
      %v484 = vrot.slane %v136, %v483
      %v485 = vlaneseq
      %v486 = vshrl.u32 %v485, 7
      %v487 = vsub.s32 1, %v486
      %v488 = vrot.slane %v136, %v487
      %v489 = vlaneseq
      %v490 = vshrl.u32 %v489, 7
      %v491 = vsub.s32 2, %v490
      %v492 = vrot.slane %v136, %v491
      %v493 = vlaneseq
      %v494 = vshrl.u32 %v493, 7
      %v495 = vsub.s32 3, %v494
      %v496 = vrot.slane %v136, %v495
      %v497 = vlaneseq
      %v498 = vshrl.u32 %v497, 7
      %v499 = vsub.s32 4, %v498
      %v500 = vrot.slane %v136, %v499
      %v501 = vlaneseq
      %v502 = vshrl.u32 %v501, 7
      %v503 = vsub.s32 5, %v502
      %v504 = vrot.slane %v136, %v503
      %v505 = vlaneseq
      %v506 = vshrl.u32 %v505, 7
      %v507 = vsub.s32 6, %v506
      %v508 = vrot.slane %v136, %v507
      %v509 = vlaneseq
      %v510 = vshrl.u32 %v509, 7
      %v511 = vsub.s32 7, %v510
      %v512 = vrot.slane %v136, %v511
      %v513 = vlaneseq
      %v514 = vshrl.u32 %v513, 7
      %v515 = vsub.s32 0, %v514
      %v516 = vrot.slane %v139, %v515
      %v517 = vlaneseq
      %v518 = vshrl.u32 %v517, 7
      %v519 = vsub.s32 1, %v518
      %v520 = vrot.slane %v139, %v519
      %v521 = vlaneseq
      %v522 = vshrl.u32 %v521, 7
      %v523 = vsub.s32 2, %v522
      %v524 = vrot.slane %v139, %v523
      %v525 = vlaneseq
      %v526 = vshrl.u32 %v525, 7
      %v527 = vsub.s32 3, %v526
      %v528 = vrot.slane %v139, %v527
      %v529 = vlaneseq
      %v530 = vshrl.u32 %v529, 7
      %v531 = vsub.s32 4, %v530
      %v532 = vrot.slane %v139, %v531
      %v533 = vlaneseq
      %v534 = vshrl.u32 %v533, 7
      %v535 = vsub.s32 5, %v534
      %v536 = vrot.slane %v139, %v535
      %v537 = vlaneseq
      %v538 = vshrl.u32 %v537, 7
      %v539 = vsub.s32 6, %v538
      %v540 = vrot.slane %v139, %v539
      %v541 = vlaneseq
      %v542 = vshrl.u32 %v541, 7
      %v543 = vsub.s32 7, %v542
      %v544 = vrot.slane %v139, %v543
      %v545 = vlaneseq
      %v546 = vshrl.u32 %v545, 7
      %v547 = vsub.s32 0, %v546
      %v548 = vrot.slane %v142, %v547
      %v549 = vlaneseq
      %v550 = vshrl.u32 %v549, 7
      %v551 = vsub.s32 1, %v550
      %v552 = vrot.slane %v142, %v551
      %v553 = vlaneseq
      %v554 = vshrl.u32 %v553, 7
      %v555 = vsub.s32 2, %v554
      %v556 = vrot.slane %v142, %v555
      %v557 = vlaneseq
      %v558 = vshrl.u32 %v557, 7
      %v559 = vsub.s32 3, %v558
      %v560 = vrot.slane %v142, %v559
      %v561 = vlaneseq
      %v562 = vshrl.u32 %v561, 7
      %v563 = vsub.s32 4, %v562
      %v564 = vrot.slane %v142, %v563
      %v565 = vlaneseq
      %v566 = vshrl.u32 %v565, 7
      %v567 = vsub.s32 5, %v566
      %v568 = vrot.slane %v142, %v567
      %v569 = vlaneseq
      %v570 = vshrl.u32 %v569, 7
      %v571 = vsub.s32 6, %v570
      %v572 = vrot.slane %v142, %v571
      %v573 = vlaneseq
      %v574 = vshrl.u32 %v573, 7
      %v575 = vsub.s32 7, %v574
      %v576 = vrot.slane %v142, %v575
      %v577 = vlaneseq
      %v578 = vshrl.u32 %v577, 7
      %v579 = vsub.s32 0, %v578
      %v580 = vrot.slane %v145, %v579
      %v581 = vlaneseq
      %v582 = vshrl.u32 %v581, 7
      %v583 = vsub.s32 1, %v582
      %v584 = vrot.slane %v145, %v583
      %v585 = vlaneseq
      %v586 = vshrl.u32 %v585, 7
      %v587 = vsub.s32 2, %v586
      %v588 = vrot.slane %v145, %v587
      %v589 = vlaneseq
      %v590 = vshrl.u32 %v589, 7
      %v591 = vsub.s32 3, %v590
      %v592 = vrot.slane %v145, %v591
      %v593 = vlaneseq
      %v594 = vshrl.u32 %v593, 7
      %v595 = vsub.s32 4, %v594
      %v596 = vrot.slane %v145, %v595
      %v597 = vlaneseq
      %v598 = vshrl.u32 %v597, 7
      %v599 = vsub.s32 5, %v598
      %v600 = vrot.slane %v145, %v599
      %v601 = vlaneseq
      %v602 = vshrl.u32 %v601, 7
      %v603 = vsub.s32 6, %v602
      %v604 = vrot.slane %v145, %v603
      %v605 = vlaneseq
      %v606 = vshrl.u32 %v605, 7
      %v607 = vsub.s32 7, %v606
      %v608 = vrot.slane %v145, %v607
      %v609 = vlaneseq
      %v610 = vshrl.u32 %v609, 7
      %v611 = vsub.s32 0, %v610
      %v612 = vrot.slane %v148, %v611
      %v613 = vlaneseq
      %v614 = vshrl.u32 %v613, 7
      %v615 = vsub.s32 1, %v614
      %v616 = vrot.slane %v148, %v615
      %v617 = vlaneseq
      %v618 = vshrl.u32 %v617, 7
      %v619 = vsub.s32 2, %v618
      %v620 = vrot.slane %v148, %v619
      %v621 = vlaneseq
      %v622 = vshrl.u32 %v621, 7
      %v623 = vsub.s32 3, %v622
      %v624 = vrot.slane %v148, %v623
      %v625 = vlaneseq
      %v626 = vshrl.u32 %v625, 7
      %v627 = vsub.s32 4, %v626
      %v628 = vrot.slane %v148, %v627
      %v629 = vlaneseq
      %v630 = vshrl.u32 %v629, 7
      %v631 = vsub.s32 5, %v630
      %v632 = vrot.slane %v148, %v631
      %v633 = vlaneseq
      %v634 = vshrl.u32 %v633, 7
      %v635 = vsub.s32 6, %v634
      %v636 = vrot.slane %v148, %v635
      %v637 = vlaneseq
      %v638 = vshrl.u32 %v637, 7
      %v639 = vsub.s32 7, %v638
      %v640 = vrot.slane %v148, %v639
      %v641 = vlaneseq
      %v642 = vshrl.u32 %v641, 7
      %v643 = vsub.s32 0, %v642
      %v644 = vrot.slane %v151, %v643
      %v645 = vlaneseq
      %v646 = vshrl.u32 %v645, 7
      %v647 = vsub.s32 1, %v646
      %v648 = vrot.slane %v151, %v647
      %v649 = vlaneseq
      %v650 = vshrl.u32 %v649, 7
      %v651 = vsub.s32 2, %v650
      %v652 = vrot.slane %v151, %v651
      %v653 = vlaneseq
      %v654 = vshrl.u32 %v653, 7
      %v655 = vsub.s32 3, %v654
      %v656 = vrot.slane %v151, %v655
      %v657 = vlaneseq
      %v658 = vshrl.u32 %v657, 7
      %v659 = vsub.s32 4, %v658
      %v660 = vrot.slane %v151, %v659
      %v661 = vlaneseq
      %v662 = vshrl.u32 %v661, 7
      %v663 = vsub.s32 5, %v662
      %v664 = vrot.slane %v151, %v663
      %v665 = vlaneseq
      %v666 = vshrl.u32 %v665, 7
      %v667 = vsub.s32 6, %v666
      %v668 = vrot.slane %v151, %v667
      %v669 = vlaneseq
      %v670 = vshrl.u32 %v669, 7
      %v671 = vsub.s32 7, %v670
      %v672 = vrot.slane %v151, %v671
      %v673 = vlaneseq
      %v674 = vshrl.u32 %v673, 7
      %v675 = vsub.s32 0, %v674
      %v676 = vrot.slane %v154, %v675
      %v677 = vlaneseq
      %v678 = vshrl.u32 %v677, 7
      %v679 = vsub.s32 1, %v678
      %v680 = vrot.slane %v154, %v679
      %v681 = vlaneseq
      %v682 = vshrl.u32 %v681, 7
      %v683 = vsub.s32 2, %v682
      %v684 = vrot.slane %v154, %v683
      %v685 = vlaneseq
      %v686 = vshrl.u32 %v685, 7
      %v687 = vsub.s32 3, %v686
      %v688 = vrot.slane %v154, %v687
      %v689 = vlaneseq
      %v690 = vshrl.u32 %v689, 7
      %v691 = vsub.s32 4, %v690
      %v692 = vrot.slane %v154, %v691
      %v693 = vlaneseq
      %v694 = vshrl.u32 %v693, 7
      %v695 = vsub.s32 5, %v694
      %v696 = vrot.slane %v154, %v695
      %v697 = vlaneseq
      %v698 = vshrl.u32 %v697, 7
      %v699 = vsub.s32 6, %v698
      %v700 = vrot.slane %v154, %v699
      %v701 = vlaneseq
      %v702 = vshrl.u32 %v701, 7
      %v703 = vsub.s32 7, %v702
      %v704 = vrot.slane %v154, %v703
      %v705 = vlaneseq
      %v706 = vshrl.u32 %v705, 7
      %v707 = vsub.s32 0, %v706
      %v708 = vrot.slane %v157, %v707
      %v709 = vlaneseq
      %v710 = vshrl.u32 %v709, 7
      %v711 = vsub.s32 1, %v710
      %v712 = vrot.slane %v157, %v711
      %v713 = vlaneseq
      %v714 = vshrl.u32 %v713, 7
      %v715 = vsub.s32 2, %v714
      %v716 = vrot.slane %v157, %v715
      %v717 = vlaneseq
      %v718 = vshrl.u32 %v717, 7
      %v719 = vsub.s32 3, %v718
      %v720 = vrot.slane %v157, %v719
      %v721 = vlaneseq
      %v722 = vshrl.u32 %v721, 7
      %v723 = vsub.s32 4, %v722
      %v724 = vrot.slane %v157, %v723
      %v725 = vlaneseq
      %v726 = vshrl.u32 %v725, 7
      %v727 = vsub.s32 5, %v726
      %v728 = vrot.slane %v157, %v727
      %v729 = vlaneseq
      %v730 = vshrl.u32 %v729, 7
      %v731 = vsub.s32 6, %v730
      %v732 = vrot.slane %v157, %v731
      %v733 = vlaneseq
      %v734 = vshrl.u32 %v733, 7
      %v735 = vsub.s32 7, %v734
      %v736 = vrot.slane %v157, %v735
      %v737 = vlaneseq
      %v738 = vshrl.u32 %v737, 7
      %v739 = vsub.s32 0, %v738
      %v740 = vrot.slane %v160, %v739
      %v741 = vlaneseq
      %v742 = vshrl.u32 %v741, 7
      %v743 = vsub.s32 1, %v742
      %v744 = vrot.slane %v160, %v743
      %v745 = vlaneseq
      %v746 = vshrl.u32 %v745, 7
      %v747 = vsub.s32 2, %v746
      %v748 = vrot.slane %v160, %v747
      %v749 = vlaneseq
      %v750 = vshrl.u32 %v749, 7
      %v751 = vsub.s32 3, %v750
      %v752 = vrot.slane %v160, %v751
      %v753 = vlaneseq
      %v754 = vshrl.u32 %v753, 7
      %v755 = vsub.s32 4, %v754
      %v756 = vrot.slane %v160, %v755
      %v757 = vlaneseq
      %v758 = vshrl.u32 %v757, 7
      %v759 = vsub.s32 5, %v758
      %v760 = vrot.slane %v160, %v759
      %v761 = vlaneseq
      %v762 = vshrl.u32 %v761, 7
      %v763 = vsub.s32 6, %v762
      %v764 = vrot.slane %v160, %v763
      %v765 = vlaneseq
      %v766 = vshrl.u32 %v765, 7
      %v767 = vsub.s32 7, %v766
      %v768 = vrot.slane %v160, %v767
      %v769 = vlaneseq
      %v770 = vshrl.u32 %v769, 7
      %v771 = vsub.s32 0, %v770
      %v772 = vrot.slane %v163, %v771
      %v773 = vlaneseq
      %v774 = vshrl.u32 %v773, 7
      %v775 = vsub.s32 1, %v774
      %v776 = vrot.slane %v163, %v775
      %v777 = vlaneseq
      %v778 = vshrl.u32 %v777, 7
      %v779 = vsub.s32 2, %v778
      %v780 = vrot.slane %v163, %v779
      %v781 = vlaneseq
      %v782 = vshrl.u32 %v781, 7
      %v783 = vsub.s32 3, %v782
      %v784 = vrot.slane %v163, %v783
      %v785 = vlaneseq
      %v786 = vshrl.u32 %v785, 7
      %v787 = vsub.s32 4, %v786
      %v788 = vrot.slane %v163, %v787
      %v789 = vlaneseq
      %v790 = vshrl.u32 %v789, 7
      %v791 = vsub.s32 5, %v790
      %v792 = vrot.slane %v163, %v791
      %v793 = vlaneseq
      %v794 = vshrl.u32 %v793, 7
      %v795 = vsub.s32 6, %v794
      %v796 = vrot.slane %v163, %v795
      %v797 = vlaneseq
      %v798 = vshrl.u32 %v797, 7
      %v799 = vsub.s32 7, %v798
      %v800 = vrot.slane %v163, %v799
      %v801 = vlaneseq
      %v802 = vshrl.u32 %v801, 7
      %v803 = vsub.s32 0, %v802
      %v804 = vrot.slane %v166, %v803
      %v805 = vlaneseq
      %v806 = vshrl.u32 %v805, 7
      %v807 = vsub.s32 1, %v806
      %v808 = vrot.slane %v166, %v807
      %v809 = vlaneseq
      %v810 = vshrl.u32 %v809, 7
      %v811 = vsub.s32 2, %v810
      %v812 = vrot.slane %v166, %v811
      %v813 = vlaneseq
      %v814 = vshrl.u32 %v813, 7
      %v815 = vsub.s32 3, %v814
      %v816 = vrot.slane %v166, %v815
      %v817 = vlaneseq
      %v818 = vshrl.u32 %v817, 7
      %v819 = vsub.s32 4, %v818
      %v820 = vrot.slane %v166, %v819
      %v821 = vlaneseq
      %v822 = vshrl.u32 %v821, 7
      %v823 = vsub.s32 5, %v822
      %v824 = vrot.slane %v166, %v823
      %v825 = vlaneseq
      %v826 = vshrl.u32 %v825, 7
      %v827 = vsub.s32 6, %v826
      %v828 = vrot.slane %v166, %v827
      %v829 = vlaneseq
      %v830 = vshrl.u32 %v829, 7
      %v831 = vsub.s32 7, %v830
      %v832 = vrot.slane %v166, %v831
      %v833 = vcombine.low %v324, %v328
      %v834 = vcombine.low %v332, %v336
      %v835 = vcombine.low %v340, %v344
      %v836 = vcombine.low %v348, %v352
      %v838 = vunpack.c.l.s4 1966171168
      %v839 = vunpack.c.0.s8 %v838
      %v840 = vlaneseq
      %v841 = vshrl.u32 %v840, 7
      %v842 = vsub.s32 %v839, %v841
      %v843 = vrot.slane %v833, %v842
      %v845 = vunpack.c.l.s4 1966171168
      %v846 = vunpack.c.0.s8 %v845
      %v847 = vlaneseq
      %v848 = vshrl.u32 %v847, 7
      %v849 = vsub.s32 %v846, %v848
      %v850 = vrot.slane %v834, %v849
      %v852 = vunpack.c.l.s4 1966171168
      %v853 = vunpack.c.0.s8 %v852
      %v854 = vlaneseq
      %v855 = vshrl.u32 %v854, 7
      %v856 = vsub.s32 %v853, %v855
      %v857 = vrot.slane %v835, %v856
      %v859 = vunpack.c.l.s4 1966171168
      %v860 = vunpack.c.0.s8 %v859
      %v861 = vlaneseq
      %v862 = vshrl.u32 %v861, 7
      %v863 = vsub.s32 %v860, %v862
      %v864 = vrot.slane %v836, %v863
      %v865 = vcombine.low %v843, %v850
      %v866 = vcombine.low %v857, %v864
      %v868 = vunpack.c.l.s4 1966171168
      %v869 = vunpack.c.0.s8 %v868
      %v870 = vlaneseq
      %v871 = vshrl.u32 %v870, 7
      %v872 = vsub.s32 %v869, %v871
      %v873 = vrot.slane %v865, %v872
      %v875 = vunpack.c.l.s4 1966171168
      %v876 = vunpack.c.0.s8 %v875
      %v877 = vlaneseq
      %v878 = vshrl.u32 %v877, 7
      %v879 = vsub.s32 %v876, %v878
      %v880 = vrot.slane %v866, %v879
      %v881 = vcombine.low %v873, %v880
      %v882 = vcombine.low %v356, %v360
      %v883 = vcombine.low %v364, %v368
      %v884 = vcombine.low %v372, %v376
      %v885 = vcombine.low %v380, %v384
      %v887 = vunpack.c.l.s4 1966171168
      %v888 = vunpack.c.0.s8 %v887
      %v889 = vlaneseq
      %v890 = vshrl.u32 %v889, 7
      %v891 = vsub.s32 %v888, %v890
      %v892 = vrot.slane %v882, %v891
      %v894 = vunpack.c.l.s4 1966171168
      %v895 = vunpack.c.0.s8 %v894
      %v896 = vlaneseq
      %v897 = vshrl.u32 %v896, 7
      %v898 = vsub.s32 %v895, %v897
      %v899 = vrot.slane %v883, %v898
      %v901 = vunpack.c.l.s4 1966171168
      %v902 = vunpack.c.0.s8 %v901
      %v903 = vlaneseq
      %v904 = vshrl.u32 %v903, 7
      %v905 = vsub.s32 %v902, %v904
      %v906 = vrot.slane %v884, %v905
      %v908 = vunpack.c.l.s4 1966171168
      %v909 = vunpack.c.0.s8 %v908
      %v910 = vlaneseq
      %v911 = vshrl.u32 %v910, 7
      %v912 = vsub.s32 %v909, %v911
      %v913 = vrot.slane %v885, %v912
      %v914 = vcombine.low %v892, %v899
      %v915 = vcombine.low %v906, %v913
      %v917 = vunpack.c.l.s4 1966171168
      %v918 = vunpack.c.0.s8 %v917
      %v919 = vlaneseq
      %v920 = vshrl.u32 %v919, 7
      %v921 = vsub.s32 %v918, %v920
      %v922 = vrot.slane %v914, %v921
      %v924 = vunpack.c.l.s4 1966171168
      %v925 = vunpack.c.0.s8 %v924
      %v926 = vlaneseq
      %v927 = vshrl.u32 %v926, 7
      %v928 = vsub.s32 %v925, %v927
      %v929 = vrot.slane %v915, %v928
      %v930 = vcombine.low %v922, %v929
      %v931 = vcombine.low %v388, %v392
      %v932 = vcombine.low %v396, %v400
      %v933 = vcombine.low %v404, %v408
      %v934 = vcombine.low %v412, %v416
      %v936 = vunpack.c.l.s4 1966171168
      %v937 = vunpack.c.0.s8 %v936
      %v938 = vlaneseq
      %v939 = vshrl.u32 %v938, 7
      %v940 = vsub.s32 %v937, %v939
      %v941 = vrot.slane %v931, %v940
      %v943 = vunpack.c.l.s4 1966171168
      %v944 = vunpack.c.0.s8 %v943
      %v945 = vlaneseq
      %v946 = vshrl.u32 %v945, 7
      %v947 = vsub.s32 %v944, %v946
      %v948 = vrot.slane %v932, %v947
      %v950 = vunpack.c.l.s4 1966171168
      %v951 = vunpack.c.0.s8 %v950
      %v952 = vlaneseq
      %v953 = vshrl.u32 %v952, 7
      %v954 = vsub.s32 %v951, %v953
      %v955 = vrot.slane %v933, %v954
      %v957 = vunpack.c.l.s4 1966171168
      %v958 = vunpack.c.0.s8 %v957
      %v959 = vlaneseq
      %v960 = vshrl.u32 %v959, 7
      %v961 = vsub.s32 %v958, %v960
      %v962 = vrot.slane %v934, %v961
      %v963 = vcombine.low %v941, %v948
      %v964 = vcombine.low %v955, %v962
      %v966 = vunpack.c.l.s4 1966171168
      %v967 = vunpack.c.0.s8 %v966
      %v968 = vlaneseq
      %v969 = vshrl.u32 %v968, 7
      %v970 = vsub.s32 %v967, %v969
      %v971 = vrot.slane %v963, %v970
      %v973 = vunpack.c.l.s4 1966171168
      %v974 = vunpack.c.0.s8 %v973
      %v975 = vlaneseq
      %v976 = vshrl.u32 %v975, 7
      %v977 = vsub.s32 %v974, %v976
      %v978 = vrot.slane %v964, %v977
      %v979 = vcombine.low %v971, %v978
      %v980 = vcombine.low %v420, %v424
      %v981 = vcombine.low %v428, %v432
      %v982 = vcombine.low %v436, %v440
      %v983 = vcombine.low %v444, %v448
      %v985 = vunpack.c.l.s4 1966171168
      %v986 = vunpack.c.0.s8 %v985
      %v987 = vlaneseq
      %v988 = vshrl.u32 %v987, 7
      %v989 = vsub.s32 %v986, %v988
      %v990 = vrot.slane %v980, %v989
      %v992 = vunpack.c.l.s4 1966171168
      %v993 = vunpack.c.0.s8 %v992
      %v994 = vlaneseq
      %v995 = vshrl.u32 %v994, 7
      %v996 = vsub.s32 %v993, %v995
      %v997 = vrot.slane %v981, %v996
      %v999 = vunpack.c.l.s4 1966171168
      %v1000 = vunpack.c.0.s8 %v999
      %v1001 = vlaneseq
      %v1002 = vshrl.u32 %v1001, 7
      %v1003 = vsub.s32 %v1000, %v1002
      %v1004 = vrot.slane %v982, %v1003
      %v1006 = vunpack.c.l.s4 1966171168
      %v1007 = vunpack.c.0.s8 %v1006
      %v1008 = vlaneseq
      %v1009 = vshrl.u32 %v1008, 7
      %v1010 = vsub.s32 %v1007, %v1009
      %v1011 = vrot.slane %v983, %v1010
      %v1012 = vcombine.low %v990, %v997
      %v1013 = vcombine.low %v1004, %v1011
      %v1015 = vunpack.c.l.s4 1966171168
      %v1016 = vunpack.c.0.s8 %v1015
      %v1017 = vlaneseq
      %v1018 = vshrl.u32 %v1017, 7
      %v1019 = vsub.s32 %v1016, %v1018
      %v1020 = vrot.slane %v1012, %v1019
      %v1022 = vunpack.c.l.s4 1966171168
      %v1023 = vunpack.c.0.s8 %v1022
      %v1024 = vlaneseq
      %v1025 = vshrl.u32 %v1024, 7
      %v1026 = vsub.s32 %v1023, %v1025
      %v1027 = vrot.slane %v1013, %v1026
      %v1028 = vcombine.low %v1020, %v1027
      %v1029 = vcombine.low %v452, %v456
      %v1030 = vcombine.low %v460, %v464
      %v1031 = vcombine.low %v468, %v472
      %v1032 = vcombine.low %v476, %v480
      %v1034 = vunpack.c.l.s4 1966171168
      %v1035 = vunpack.c.0.s8 %v1034
      %v1036 = vlaneseq
      %v1037 = vshrl.u32 %v1036, 7
      %v1038 = vsub.s32 %v1035, %v1037
      %v1039 = vrot.slane %v1029, %v1038
      %v1041 = vunpack.c.l.s4 1966171168
      %v1042 = vunpack.c.0.s8 %v1041
      %v1043 = vlaneseq
      %v1044 = vshrl.u32 %v1043, 7
      %v1045 = vsub.s32 %v1042, %v1044
      %v1046 = vrot.slane %v1030, %v1045
      %v1048 = vunpack.c.l.s4 1966171168
      %v1049 = vunpack.c.0.s8 %v1048
      %v1050 = vlaneseq
      %v1051 = vshrl.u32 %v1050, 7
      %v1052 = vsub.s32 %v1049, %v1051
      %v1053 = vrot.slane %v1031, %v1052
      %v1055 = vunpack.c.l.s4 1966171168
      %v1056 = vunpack.c.0.s8 %v1055
      %v1057 = vlaneseq
      %v1058 = vshrl.u32 %v1057, 7
      %v1059 = vsub.s32 %v1056, %v1058
      %v1060 = vrot.slane %v1032, %v1059
      %v1061 = vcombine.low %v1039, %v1046
      %v1062 = vcombine.low %v1053, %v1060
      %v1064 = vunpack.c.l.s4 1966171168
      %v1065 = vunpack.c.0.s8 %v1064
      %v1066 = vlaneseq
      %v1067 = vshrl.u32 %v1066, 7
      %v1068 = vsub.s32 %v1065, %v1067
      %v1069 = vrot.slane %v1061, %v1068
      %v1071 = vunpack.c.l.s4 1966171168
      %v1072 = vunpack.c.0.s8 %v1071
      %v1073 = vlaneseq
      %v1074 = vshrl.u32 %v1073, 7
      %v1075 = vsub.s32 %v1072, %v1074
      %v1076 = vrot.slane %v1062, %v1075
      %v1077 = vcombine.low %v1069, %v1076
      %v1078 = vcombine.low %v484, %v488
      %v1079 = vcombine.low %v492, %v496
      %v1080 = vcombine.low %v500, %v504
      %v1081 = vcombine.low %v508, %v512
      %v1083 = vunpack.c.l.s4 1966171168
      %v1084 = vunpack.c.0.s8 %v1083
      %v1085 = vlaneseq
      %v1086 = vshrl.u32 %v1085, 7
      %v1087 = vsub.s32 %v1084, %v1086
      %v1088 = vrot.slane %v1078, %v1087
      %v1090 = vunpack.c.l.s4 1966171168
      %v1091 = vunpack.c.0.s8 %v1090
      %v1092 = vlaneseq
      %v1093 = vshrl.u32 %v1092, 7
      %v1094 = vsub.s32 %v1091, %v1093
      %v1095 = vrot.slane %v1079, %v1094
      %v1097 = vunpack.c.l.s4 1966171168
      %v1098 = vunpack.c.0.s8 %v1097
      %v1099 = vlaneseq
      %v1100 = vshrl.u32 %v1099, 7
      %v1101 = vsub.s32 %v1098, %v1100
      %v1102 = vrot.slane %v1080, %v1101
      %v1104 = vunpack.c.l.s4 1966171168
      %v1105 = vunpack.c.0.s8 %v1104
      %v1106 = vlaneseq
      %v1107 = vshrl.u32 %v1106, 7
      %v1108 = vsub.s32 %v1105, %v1107
      %v1109 = vrot.slane %v1081, %v1108
      %v1110 = vcombine.low %v1088, %v1095
      %v1111 = vcombine.low %v1102, %v1109
      %v1113 = vunpack.c.l.s4 1966171168
      %v1114 = vunpack.c.0.s8 %v1113
      %v1115 = vlaneseq
      %v1116 = vshrl.u32 %v1115, 7
      %v1117 = vsub.s32 %v1114, %v1116
      %v1118 = vrot.slane %v1110, %v1117
      %v1120 = vunpack.c.l.s4 1966171168
      %v1121 = vunpack.c.0.s8 %v1120
      %v1122 = vlaneseq
      %v1123 = vshrl.u32 %v1122, 7
      %v1124 = vsub.s32 %v1121, %v1123
      %v1125 = vrot.slane %v1111, %v1124
      %v1126 = vcombine.low %v1118, %v1125
      %v1127 = vcombine.low %v516, %v520
      %v1128 = vcombine.low %v524, %v528
      %v1129 = vcombine.low %v532, %v536
      %v1130 = vcombine.low %v540, %v544
      %v1132 = vunpack.c.l.s4 1966171168
      %v1133 = vunpack.c.0.s8 %v1132
      %v1134 = vlaneseq
      %v1135 = vshrl.u32 %v1134, 7
      %v1136 = vsub.s32 %v1133, %v1135
      %v1137 = vrot.slane %v1127, %v1136
      %v1139 = vunpack.c.l.s4 1966171168
      %v1140 = vunpack.c.0.s8 %v1139
      %v1141 = vlaneseq
      %v1142 = vshrl.u32 %v1141, 7
      %v1143 = vsub.s32 %v1140, %v1142
      %v1144 = vrot.slane %v1128, %v1143
      %v1146 = vunpack.c.l.s4 1966171168
      %v1147 = vunpack.c.0.s8 %v1146
      %v1148 = vlaneseq
      %v1149 = vshrl.u32 %v1148, 7
      %v1150 = vsub.s32 %v1147, %v1149
      %v1151 = vrot.slane %v1129, %v1150
      %v1153 = vunpack.c.l.s4 1966171168
      %v1154 = vunpack.c.0.s8 %v1153
      %v1155 = vlaneseq
      %v1156 = vshrl.u32 %v1155, 7
      %v1157 = vsub.s32 %v1154, %v1156
      %v1158 = vrot.slane %v1130, %v1157
      %v1159 = vcombine.low %v1137, %v1144
      %v1160 = vcombine.low %v1151, %v1158
      %v1162 = vunpack.c.l.s4 1966171168
      %v1163 = vunpack.c.0.s8 %v1162
      %v1164 = vlaneseq
      %v1165 = vshrl.u32 %v1164, 7
      %v1166 = vsub.s32 %v1163, %v1165
      %v1167 = vrot.slane %v1159, %v1166
      %v1169 = vunpack.c.l.s4 1966171168
      %v1170 = vunpack.c.0.s8 %v1169
      %v1171 = vlaneseq
      %v1172 = vshrl.u32 %v1171, 7
      %v1173 = vsub.s32 %v1170, %v1172
      %v1174 = vrot.slane %v1160, %v1173
      %v1175 = vcombine.low %v1167, %v1174
      %v1176 = vcombine.low %v548, %v552
      %v1177 = vcombine.low %v556, %v560
      %v1178 = vcombine.low %v564, %v568
      %v1179 = vcombine.low %v572, %v576
      %v1181 = vunpack.c.l.s4 1966171168
      %v1182 = vunpack.c.0.s8 %v1181
      %v1183 = vlaneseq
      %v1184 = vshrl.u32 %v1183, 7
      %v1185 = vsub.s32 %v1182, %v1184
      %v1186 = vrot.slane %v1176, %v1185
      %v1188 = vunpack.c.l.s4 1966171168
      %v1189 = vunpack.c.0.s8 %v1188
      %v1190 = vlaneseq
      %v1191 = vshrl.u32 %v1190, 7
      %v1192 = vsub.s32 %v1189, %v1191
      %v1193 = vrot.slane %v1177, %v1192
      %v1195 = vunpack.c.l.s4 1966171168
      %v1196 = vunpack.c.0.s8 %v1195
      %v1197 = vlaneseq
      %v1198 = vshrl.u32 %v1197, 7
      %v1199 = vsub.s32 %v1196, %v1198
      %v1200 = vrot.slane %v1178, %v1199
      %v1202 = vunpack.c.l.s4 1966171168
      %v1203 = vunpack.c.0.s8 %v1202
      %v1204 = vlaneseq
      %v1205 = vshrl.u32 %v1204, 7
      %v1206 = vsub.s32 %v1203, %v1205
      %v1207 = vrot.slane %v1179, %v1206
      %v1208 = vcombine.low %v1186, %v1193
      %v1209 = vcombine.low %v1200, %v1207
      %v1211 = vunpack.c.l.s4 1966171168
      %v1212 = vunpack.c.0.s8 %v1211
      %v1213 = vlaneseq
      %v1214 = vshrl.u32 %v1213, 7
      %v1215 = vsub.s32 %v1212, %v1214
      %v1216 = vrot.slane %v1208, %v1215
      %v1218 = vunpack.c.l.s4 1966171168
      %v1219 = vunpack.c.0.s8 %v1218
      %v1220 = vlaneseq
      %v1221 = vshrl.u32 %v1220, 7
      %v1222 = vsub.s32 %v1219, %v1221
      %v1223 = vrot.slane %v1209, %v1222
      %v1224 = vcombine.low %v1216, %v1223
      %v1225 = vcombine.low %v580, %v584
      %v1226 = vcombine.low %v588, %v592
      %v1227 = vcombine.low %v596, %v600
      %v1228 = vcombine.low %v604, %v608
      %v1230 = vunpack.c.l.s4 1966171168
      %v1231 = vunpack.c.0.s8 %v1230
      %v1232 = vlaneseq
      %v1233 = vshrl.u32 %v1232, 7
      %v1234 = vsub.s32 %v1231, %v1233
      %v1235 = vrot.slane %v1225, %v1234
      %v1237 = vunpack.c.l.s4 1966171168
      %v1238 = vunpack.c.0.s8 %v1237
      %v1239 = vlaneseq
      %v1240 = vshrl.u32 %v1239, 7
      %v1241 = vsub.s32 %v1238, %v1240
      %v1242 = vrot.slane %v1226, %v1241
      %v1244 = vunpack.c.l.s4 1966171168
      %v1245 = vunpack.c.0.s8 %v1244
      %v1246 = vlaneseq
      %v1247 = vshrl.u32 %v1246, 7
      %v1248 = vsub.s32 %v1245, %v1247
      %v1249 = vrot.slane %v1227, %v1248
      %v1251 = vunpack.c.l.s4 1966171168
      %v1252 = vunpack.c.0.s8 %v1251
      %v1253 = vlaneseq
      %v1254 = vshrl.u32 %v1253, 7
      %v1255 = vsub.s32 %v1252, %v1254
      %v1256 = vrot.slane %v1228, %v1255
      %v1257 = vcombine.low %v1235, %v1242
      %v1258 = vcombine.low %v1249, %v1256
      %v1260 = vunpack.c.l.s4 1966171168
      %v1261 = vunpack.c.0.s8 %v1260
      %v1262 = vlaneseq
      %v1263 = vshrl.u32 %v1262, 7
      %v1264 = vsub.s32 %v1261, %v1263
      %v1265 = vrot.slane %v1257, %v1264
      %v1267 = vunpack.c.l.s4 1966171168
      %v1268 = vunpack.c.0.s8 %v1267
      %v1269 = vlaneseq
      %v1270 = vshrl.u32 %v1269, 7
      %v1271 = vsub.s32 %v1268, %v1270
      %v1272 = vrot.slane %v1258, %v1271
      %v1273 = vcombine.low %v1265, %v1272
      %v1274 = vcombine.low %v612, %v616
      %v1275 = vcombine.low %v620, %v624
      %v1276 = vcombine.low %v628, %v632
      %v1277 = vcombine.low %v636, %v640
      %v1279 = vunpack.c.l.s4 1966171168
      %v1280 = vunpack.c.0.s8 %v1279
      %v1281 = vlaneseq
      %v1282 = vshrl.u32 %v1281, 7
      %v1283 = vsub.s32 %v1280, %v1282
      %v1284 = vrot.slane %v1274, %v1283
      %v1286 = vunpack.c.l.s4 1966171168
      %v1287 = vunpack.c.0.s8 %v1286
      %v1288 = vlaneseq
      %v1289 = vshrl.u32 %v1288, 7
      %v1290 = vsub.s32 %v1287, %v1289
      %v1291 = vrot.slane %v1275, %v1290
      %v1293 = vunpack.c.l.s4 1966171168
      %v1294 = vunpack.c.0.s8 %v1293
      %v1295 = vlaneseq
      %v1296 = vshrl.u32 %v1295, 7
      %v1297 = vsub.s32 %v1294, %v1296
      %v1298 = vrot.slane %v1276, %v1297
      %v1300 = vunpack.c.l.s4 1966171168
      %v1301 = vunpack.c.0.s8 %v1300
      %v1302 = vlaneseq
      %v1303 = vshrl.u32 %v1302, 7
      %v1304 = vsub.s32 %v1301, %v1303
      %v1305 = vrot.slane %v1277, %v1304
      %v1306 = vcombine.low %v1284, %v1291
      %v1307 = vcombine.low %v1298, %v1305
      %v1309 = vunpack.c.l.s4 1966171168
      %v1310 = vunpack.c.0.s8 %v1309
      %v1311 = vlaneseq
      %v1312 = vshrl.u32 %v1311, 7
      %v1313 = vsub.s32 %v1310, %v1312
      %v1314 = vrot.slane %v1306, %v1313
      %v1316 = vunpack.c.l.s4 1966171168
      %v1317 = vunpack.c.0.s8 %v1316
      %v1318 = vlaneseq
      %v1319 = vshrl.u32 %v1318, 7
      %v1320 = vsub.s32 %v1317, %v1319
      %v1321 = vrot.slane %v1307, %v1320
      %v1322 = vcombine.low %v1314, %v1321
      %v1323 = vcombine.low %v644, %v648
      %v1324 = vcombine.low %v652, %v656
      %v1325 = vcombine.low %v660, %v664
      %v1326 = vcombine.low %v668, %v672
      %v1328 = vunpack.c.l.s4 1966171168
      %v1329 = vunpack.c.0.s8 %v1328
      %v1330 = vlaneseq
      %v1331 = vshrl.u32 %v1330, 7
      %v1332 = vsub.s32 %v1329, %v1331
      %v1333 = vrot.slane %v1323, %v1332
      %v1335 = vunpack.c.l.s4 1966171168
      %v1336 = vunpack.c.0.s8 %v1335
      %v1337 = vlaneseq
      %v1338 = vshrl.u32 %v1337, 7
      %v1339 = vsub.s32 %v1336, %v1338
      %v1340 = vrot.slane %v1324, %v1339
      %v1342 = vunpack.c.l.s4 1966171168
      %v1343 = vunpack.c.0.s8 %v1342
      %v1344 = vlaneseq
      %v1345 = vshrl.u32 %v1344, 7
      %v1346 = vsub.s32 %v1343, %v1345
      %v1347 = vrot.slane %v1325, %v1346
      %v1349 = vunpack.c.l.s4 1966171168
      %v1350 = vunpack.c.0.s8 %v1349
      %v1351 = vlaneseq
      %v1352 = vshrl.u32 %v1351, 7
      %v1353 = vsub.s32 %v1350, %v1352
      %v1354 = vrot.slane %v1326, %v1353
      %v1355 = vcombine.low %v1333, %v1340
      %v1356 = vcombine.low %v1347, %v1354
      %v1358 = vunpack.c.l.s4 1966171168
      %v1359 = vunpack.c.0.s8 %v1358
      %v1360 = vlaneseq
      %v1361 = vshrl.u32 %v1360, 7
      %v1362 = vsub.s32 %v1359, %v1361
      %v1363 = vrot.slane %v1355, %v1362
      %v1365 = vunpack.c.l.s4 1966171168
      %v1366 = vunpack.c.0.s8 %v1365
      %v1367 = vlaneseq
      %v1368 = vshrl.u32 %v1367, 7
      %v1369 = vsub.s32 %v1366, %v1368
      %v1370 = vrot.slane %v1356, %v1369
      %v1371 = vcombine.low %v1363, %v1370
      %v1372 = vcombine.low %v676, %v680
      %v1373 = vcombine.low %v684, %v688
      %v1374 = vcombine.low %v692, %v696
      %v1375 = vcombine.low %v700, %v704
      %v1377 = vunpack.c.l.s4 1966171168
      %v1378 = vunpack.c.0.s8 %v1377
      %v1379 = vlaneseq
      %v1380 = vshrl.u32 %v1379, 7
      %v1381 = vsub.s32 %v1378, %v1380
      %v1382 = vrot.slane %v1372, %v1381
      %v1384 = vunpack.c.l.s4 1966171168
      %v1385 = vunpack.c.0.s8 %v1384
      %v1386 = vlaneseq
      %v1387 = vshrl.u32 %v1386, 7
      %v1388 = vsub.s32 %v1385, %v1387
      %v1389 = vrot.slane %v1373, %v1388
      %v1391 = vunpack.c.l.s4 1966171168
      %v1392 = vunpack.c.0.s8 %v1391
      %v1393 = vlaneseq
      %v1394 = vshrl.u32 %v1393, 7
      %v1395 = vsub.s32 %v1392, %v1394
      %v1396 = vrot.slane %v1374, %v1395
      %v1398 = vunpack.c.l.s4 1966171168
      %v1399 = vunpack.c.0.s8 %v1398
      %v1400 = vlaneseq
      %v1401 = vshrl.u32 %v1400, 7
      %v1402 = vsub.s32 %v1399, %v1401
      %v1403 = vrot.slane %v1375, %v1402
      %v1404 = vcombine.low %v1382, %v1389
      %v1405 = vcombine.low %v1396, %v1403
      %v1407 = vunpack.c.l.s4 1966171168
      %v1408 = vunpack.c.0.s8 %v1407
      %v1409 = vlaneseq
      %v1410 = vshrl.u32 %v1409, 7
      %v1411 = vsub.s32 %v1408, %v1410
      %v1412 = vrot.slane %v1404, %v1411
      %v1414 = vunpack.c.l.s4 1966171168
      %v1415 = vunpack.c.0.s8 %v1414
      %v1416 = vlaneseq
      %v1417 = vshrl.u32 %v1416, 7
      %v1418 = vsub.s32 %v1415, %v1417
      %v1419 = vrot.slane %v1405, %v1418
      %v1420 = vcombine.low %v1412, %v1419
      %v1421 = vcombine.low %v708, %v712
      %v1422 = vcombine.low %v716, %v720
      %v1423 = vcombine.low %v724, %v728
      %v1424 = vcombine.low %v732, %v736
      %v1426 = vunpack.c.l.s4 1966171168
      %v1427 = vunpack.c.0.s8 %v1426
      %v1428 = vlaneseq
      %v1429 = vshrl.u32 %v1428, 7
      %v1430 = vsub.s32 %v1427, %v1429
      %v1431 = vrot.slane %v1421, %v1430
      %v1433 = vunpack.c.l.s4 1966171168
      %v1434 = vunpack.c.0.s8 %v1433
      %v1435 = vlaneseq
      %v1436 = vshrl.u32 %v1435, 7
      %v1437 = vsub.s32 %v1434, %v1436
      %v1438 = vrot.slane %v1422, %v1437
      %v1440 = vunpack.c.l.s4 1966171168
      %v1441 = vunpack.c.0.s8 %v1440
      %v1442 = vlaneseq
      %v1443 = vshrl.u32 %v1442, 7
      %v1444 = vsub.s32 %v1441, %v1443
      %v1445 = vrot.slane %v1423, %v1444
      %v1447 = vunpack.c.l.s4 1966171168
      %v1448 = vunpack.c.0.s8 %v1447
      %v1449 = vlaneseq
      %v1450 = vshrl.u32 %v1449, 7
      %v1451 = vsub.s32 %v1448, %v1450
      %v1452 = vrot.slane %v1424, %v1451
      %v1453 = vcombine.low %v1431, %v1438
      %v1454 = vcombine.low %v1445, %v1452
      %v1456 = vunpack.c.l.s4 1966171168
      %v1457 = vunpack.c.0.s8 %v1456
      %v1458 = vlaneseq
      %v1459 = vshrl.u32 %v1458, 7
      %v1460 = vsub.s32 %v1457, %v1459
      %v1461 = vrot.slane %v1453, %v1460
      %v1463 = vunpack.c.l.s4 1966171168
      %v1464 = vunpack.c.0.s8 %v1463
      %v1465 = vlaneseq
      %v1466 = vshrl.u32 %v1465, 7
      %v1467 = vsub.s32 %v1464, %v1466
      %v1468 = vrot.slane %v1454, %v1467
      %v1469 = vcombine.low %v1461, %v1468
      %v1470 = vcombine.low %v740, %v744
      %v1471 = vcombine.low %v748, %v752
      %v1472 = vcombine.low %v756, %v760
      %v1473 = vcombine.low %v764, %v768
      %v1475 = vunpack.c.l.s4 1966171168
      %v1476 = vunpack.c.0.s8 %v1475
      %v1477 = vlaneseq
      %v1478 = vshrl.u32 %v1477, 7
      %v1479 = vsub.s32 %v1476, %v1478
      %v1480 = vrot.slane %v1470, %v1479
      %v1482 = vunpack.c.l.s4 1966171168
      %v1483 = vunpack.c.0.s8 %v1482
      %v1484 = vlaneseq
      %v1485 = vshrl.u32 %v1484, 7
      %v1486 = vsub.s32 %v1483, %v1485
      %v1487 = vrot.slane %v1471, %v1486
      %v1489 = vunpack.c.l.s4 1966171168
      %v1490 = vunpack.c.0.s8 %v1489
      %v1491 = vlaneseq
      %v1492 = vshrl.u32 %v1491, 7
      %v1493 = vsub.s32 %v1490, %v1492
      %v1494 = vrot.slane %v1472, %v1493
      %v1496 = vunpack.c.l.s4 1966171168
      %v1497 = vunpack.c.0.s8 %v1496
      %v1498 = vlaneseq
      %v1499 = vshrl.u32 %v1498, 7
      %v1500 = vsub.s32 %v1497, %v1499
      %v1501 = vrot.slane %v1473, %v1500
      %v1502 = vcombine.low %v1480, %v1487
      %v1503 = vcombine.low %v1494, %v1501
      %v1505 = vunpack.c.l.s4 1966171168
      %v1506 = vunpack.c.0.s8 %v1505
      %v1507 = vlaneseq
      %v1508 = vshrl.u32 %v1507, 7
      %v1509 = vsub.s32 %v1506, %v1508
      %v1510 = vrot.slane %v1502, %v1509
      %v1512 = vunpack.c.l.s4 1966171168
      %v1513 = vunpack.c.0.s8 %v1512
      %v1514 = vlaneseq
      %v1515 = vshrl.u32 %v1514, 7
      %v1516 = vsub.s32 %v1513, %v1515
      %v1517 = vrot.slane %v1503, %v1516
      %v1518 = vcombine.low %v1510, %v1517
      %v1519 = vcombine.low %v772, %v776
      %v1520 = vcombine.low %v780, %v784
      %v1521 = vcombine.low %v788, %v792
      %v1522 = vcombine.low %v796, %v800
      %v1524 = vunpack.c.l.s4 1966171168
      %v1525 = vunpack.c.0.s8 %v1524
      %v1526 = vlaneseq
      %v1527 = vshrl.u32 %v1526, 7
      %v1528 = vsub.s32 %v1525, %v1527
      %v1529 = vrot.slane %v1519, %v1528
      %v1531 = vunpack.c.l.s4 1966171168
      %v1532 = vunpack.c.0.s8 %v1531
      %v1533 = vlaneseq
      %v1534 = vshrl.u32 %v1533, 7
      %v1535 = vsub.s32 %v1532, %v1534
      %v1536 = vrot.slane %v1520, %v1535
      %v1538 = vunpack.c.l.s4 1966171168
      %v1539 = vunpack.c.0.s8 %v1538
      %v1540 = vlaneseq
      %v1541 = vshrl.u32 %v1540, 7
      %v1542 = vsub.s32 %v1539, %v1541
      %v1543 = vrot.slane %v1521, %v1542
      %v1545 = vunpack.c.l.s4 1966171168
      %v1546 = vunpack.c.0.s8 %v1545
      %v1547 = vlaneseq
      %v1548 = vshrl.u32 %v1547, 7
      %v1549 = vsub.s32 %v1546, %v1548
      %v1550 = vrot.slane %v1522, %v1549
      %v1551 = vcombine.low %v1529, %v1536
      %v1552 = vcombine.low %v1543, %v1550
      %v1554 = vunpack.c.l.s4 1966171168
      %v1555 = vunpack.c.0.s8 %v1554
      %v1556 = vlaneseq
      %v1557 = vshrl.u32 %v1556, 7
      %v1558 = vsub.s32 %v1555, %v1557
      %v1559 = vrot.slane %v1551, %v1558
      %v1561 = vunpack.c.l.s4 1966171168
      %v1562 = vunpack.c.0.s8 %v1561
      %v1563 = vlaneseq
      %v1564 = vshrl.u32 %v1563, 7
      %v1565 = vsub.s32 %v1562, %v1564
      %v1566 = vrot.slane %v1552, %v1565
      %v1567 = vcombine.low %v1559, %v1566
      %v1568 = vcombine.low %v804, %v808
      %v1569 = vcombine.low %v812, %v816
      %v1570 = vcombine.low %v820, %v824
      %v1571 = vcombine.low %v828, %v832
      %v1573 = vunpack.c.l.s4 1966171168
      %v1574 = vunpack.c.0.s8 %v1573
      %v1575 = vlaneseq
      %v1576 = vshrl.u32 %v1575, 7
      %v1577 = vsub.s32 %v1574, %v1576
      %v1578 = vrot.slane %v1568, %v1577
      %v1580 = vunpack.c.l.s4 1966171168
      %v1581 = vunpack.c.0.s8 %v1580
      %v1582 = vlaneseq
      %v1583 = vshrl.u32 %v1582, 7
      %v1584 = vsub.s32 %v1581, %v1583
      %v1585 = vrot.slane %v1569, %v1584
      %v1587 = vunpack.c.l.s4 1966171168
      %v1588 = vunpack.c.0.s8 %v1587
      %v1589 = vlaneseq
      %v1590 = vshrl.u32 %v1589, 7
      %v1591 = vsub.s32 %v1588, %v1590
      %v1592 = vrot.slane %v1570, %v1591
      %v1594 = vunpack.c.l.s4 1966171168
      %v1595 = vunpack.c.0.s8 %v1594
      %v1596 = vlaneseq
      %v1597 = vshrl.u32 %v1596, 7
      %v1598 = vsub.s32 %v1595, %v1597
      %v1599 = vrot.slane %v1571, %v1598
      %v1600 = vcombine.low %v1578, %v1585
      %v1601 = vcombine.low %v1592, %v1599
      %v1603 = vunpack.c.l.s4 1966171168
      %v1604 = vunpack.c.0.s8 %v1603
      %v1605 = vlaneseq
      %v1606 = vshrl.u32 %v1605, 7
      %v1607 = vsub.s32 %v1604, %v1606
      %v1608 = vrot.slane %v1600, %v1607
      %v1610 = vunpack.c.l.s4 1966171168
      %v1611 = vunpack.c.0.s8 %v1610
      %v1612 = vlaneseq
      %v1613 = vshrl.u32 %v1612, 7
      %v1614 = vsub.s32 %v1611, %v1613
      %v1615 = vrot.slane %v1601, %v1614
      %v1616 = vcombine.low %v1608, %v1615
      %1617 = vset.pattern.permute.xlu0 0
      %1618 = vperm.xlu0 %1617, %v881
      %v1619 = vpop.permute.xlu0 %1618
      %1620 = vset.pattern.permute.xlu0 0
      %1621 = vperm.xlu0 %1620, %v930
      %v1622 = vpop.permute.xlu0 %1621
      %1623 = vset.pattern.permute.xlu0 0
      %1624 = vperm.xlu0 %1623, %v979
      %v1625 = vpop.permute.xlu0 %1624
      %1626 = vset.pattern.permute.xlu0 0
      %1627 = vperm.xlu0 %1626, %v1028
      %v1628 = vpop.permute.xlu0 %1627
      %1629 = vset.pattern.permute.xlu0 0
      %1630 = vperm.xlu0 %1629, %v1077
      %v1631 = vpop.permute.xlu0 %1630
      %1632 = vset.pattern.permute.xlu0 0
      %1633 = vperm.xlu0 %1632, %v1126
      %v1634 = vpop.permute.xlu0 %1633
      %1635 = vset.pattern.permute.xlu0 0
      %1636 = vperm.xlu0 %1635, %v1175
      %v1637 = vpop.permute.xlu0 %1636
      %1638 = vset.pattern.permute.xlu0 0
      %1639 = vperm.xlu0 %1638, %v1224
      %v1640 = vpop.permute.xlu0 %1639
      %1641 = vset.pattern.permute.xlu0 0
      %1642 = vperm.xlu0 %1641, %v1273
      %v1643 = vpop.permute.xlu0 %1642
      %1644 = vset.pattern.permute.xlu0 0
      %1645 = vperm.xlu0 %1644, %v1322
      %v1646 = vpop.permute.xlu0 %1645
      %1647 = vset.pattern.permute.xlu0 0
      %1648 = vperm.xlu0 %1647, %v1371
      %v1649 = vpop.permute.xlu0 %1648
      %1650 = vset.pattern.permute.xlu0 0
      %1651 = vperm.xlu0 %1650, %v1420
      %v1652 = vpop.permute.xlu0 %1651
      %1653 = vset.pattern.permute.xlu0 0
      %1654 = vperm.xlu0 %1653, %v1469
      %v1655 = vpop.permute.xlu0 %1654
      %1656 = vset.pattern.permute.xlu0 0
      %1657 = vperm.xlu0 %1656, %v1518
      %v1658 = vpop.permute.xlu0 %1657
      %1659 = vset.pattern.permute.xlu0 0
      %1660 = vperm.xlu0 %1659, %v1567
      %v1661 = vpop.permute.xlu0 %1660
      %1662 = vset.pattern.permute.xlu0 0
      %1663 = vperm.xlu0 %1662, %v1616
      %v1664 = vpop.permute.xlu0 %1663
      %v1665 = vlaneseq
      %v1666 = vand.u32 %v1665, 127
      %v1667 = vlaneseq
      %v1668 = vshrl.u32 %v1667, 7
      %v1669 = vsub.s32 %v1666, %v1668
      %v1670 = vrot.slane %v1619, %v1669
      %v1671 = vadd.s32 %v1666, 4294967288
      %v1672 = vlaneseq
      %v1673 = vshrl.u32 %v1672, 7
      %v1674 = vsub.s32 %v1671, %v1673
      %v1675 = vrot.slane %v1622, %v1674
      %vm1676 = vcmask 130112
      %v1677 = vsel %vm1676, %v1675, %v1670
      %v1678 = vadd.s32 %v1666, 4294967280
      %v1679 = vlaneseq
      %v1680 = vshrl.u32 %v1679, 7
      %v1681 = vsub.s32 %v1678, %v1680
      %v1682 = vrot.slane %v1625, %v1681
      %vm1683 = vcmask 195712
      %v1684 = vsel %vm1683, %v1682, %v1677
      %v1685 = vadd.s32 %v1666, 4294967272
      %v1686 = vlaneseq
      %v1687 = vshrl.u32 %v1686, 7
      %v1688 = vsub.s32 %v1685, %v1687
      %v1689 = vrot.slane %v1628, %v1688
      %vm1690 = vcmask 261312
      %v1691 = vsel %vm1690, %v1689, %v1684
      %v1692 = vadd.s32 %v1666, 4294967264
      %v1693 = vlaneseq
      %v1694 = vshrl.u32 %v1693, 7
      %v1695 = vsub.s32 %v1692, %v1694
      %v1696 = vrot.slane %v1631, %v1695
      %vm1697 = vcmask 326912
      %v1698 = vsel %vm1697, %v1696, %v1691
      %v1699 = vadd.s32 %v1666, 4294967256
      %v1700 = vlaneseq
      %v1701 = vshrl.u32 %v1700, 7
      %v1702 = vsub.s32 %v1699, %v1701
      %v1703 = vrot.slane %v1634, %v1702
      %vm1704 = vcmask 392512
      %v1705 = vsel %vm1704, %v1703, %v1698
      %v1706 = vadd.s32 %v1666, 4294967248
      %v1707 = vlaneseq
      %v1708 = vshrl.u32 %v1707, 7
      %v1709 = vsub.s32 %v1706, %v1708
      %v1710 = vrot.slane %v1637, %v1709
      %vm1711 = vcmask 458112
      %v1712 = vsel %vm1711, %v1710, %v1705
      %v1713 = vadd.s32 %v1666, 4294967240
      %v1714 = vlaneseq
      %v1715 = vshrl.u32 %v1714, 7
      %v1716 = vsub.s32 %v1713, %v1715
      %v1717 = vrot.slane %v1640, %v1716
      %vm1718 = vcmask 523712
      %v1719 = vsel %vm1718, %v1717, %v1712
      %v1720 = vadd.s32 %v1666, 4294967232
      %v1721 = vlaneseq
      %v1722 = vshrl.u32 %v1721, 7
      %v1723 = vsub.s32 %v1720, %v1722
      %v1724 = vrot.slane %v1643, %v1723
      %vm1725 = vcmask 589312
      %v1726 = vsel %vm1725, %v1724, %v1719
      %v1727 = vadd.s32 %v1666, 4294967224
      %v1728 = vlaneseq
      %v1729 = vshrl.u32 %v1728, 7
      %v1730 = vsub.s32 %v1727, %v1729
      %v1731 = vrot.slane %v1646, %v1730
      %vm1732 = vcmask 654912
      %v1733 = vsel %vm1732, %v1731, %v1726
      %v1734 = vadd.s32 %v1666, 4294967216
      %v1735 = vlaneseq
      %v1736 = vshrl.u32 %v1735, 7
      %v1737 = vsub.s32 %v1734, %v1736
      %v1738 = vrot.slane %v1649, %v1737
      %vm1739 = vcmask 720512
      %v1740 = vsel %vm1739, %v1738, %v1733
      %v1741 = vadd.s32 %v1666, 4294967208
      %v1742 = vlaneseq
      %v1743 = vshrl.u32 %v1742, 7
      %v1744 = vsub.s32 %v1741, %v1743
      %v1745 = vrot.slane %v1652, %v1744
      %vm1746 = vcmask 786112
      %v1747 = vsel %vm1746, %v1745, %v1740
      %v1748 = vadd.s32 %v1666, 4294967200
      %v1749 = vlaneseq
      %v1750 = vshrl.u32 %v1749, 7
      %v1751 = vsub.s32 %v1748, %v1750
      %v1752 = vrot.slane %v1655, %v1751
      %vm1753 = vcmask 851712
      %v1754 = vsel %vm1753, %v1752, %v1747
      %v1755 = vadd.s32 %v1666, 4294967192
      %v1756 = vlaneseq
      %v1757 = vshrl.u32 %v1756, 7
      %v1758 = vsub.s32 %v1755, %v1757
      %v1759 = vrot.slane %v1658, %v1758
      %vm1760 = vcmask 917312
      %v1761 = vsel %vm1760, %v1759, %v1754
      %v1762 = vadd.s32 %v1666, 4294967184
      %v1763 = vlaneseq
      %v1764 = vshrl.u32 %v1763, 7
      %v1765 = vsub.s32 %v1762, %v1764
      %v1766 = vrot.slane %v1661, %v1765
      %vm1767 = vcmask 982912
      %v1768 = vsel %vm1767, %v1766, %v1761
      %v1769 = vadd.s32 %v1666, 4294967176
      %v1770 = vlaneseq
      %v1771 = vshrl.u32 %v1770, 7
      %v1772 = vsub.s32 %v1769, %v1771
      %v1773 = vrot.slane %v1664, %v1772
      %vm1774 = vcmask 1048512
      %v1775 = vsel %vm1774, %v1773, %v1768
      %v1777 = vunpack.c.l.s4 1966171168
      %v1778 = vunpack.c.0.s8 %v1777
      %v1779 = vlaneseq
      %v1780 = vshrl.u32 %v1779, 7
      %v1781 = vsub.s32 %v1778, %v1780
      %v1782 = vrot.slane %v1775, %v1781
      %v1784 = vunpack.c.l.s4 1966171168
      %v1785 = vunpack.c.0.s8 %v1784
      %v1786 = vlaneseq
      %v1787 = vshrl.u32 %v1786, 7
      %v1788 = vsub.s32 %v1785, %v1787
      %v1789 = vrot.slane %v1782, %v1788
      %v1791 = vadd.f32 %v304, %v1789
      %1792 = vst [vmem:[#allocation9] sm:$0x1] %v1791
    $region33: #{tpu_custom_call.1} parent=1 // pred_fallthru
      _
    // Predicated region
    $region34: #{tpu_custom_call.1} parent=1 // pred_check
      %p1793 = pneg %p167
    $region35: #{tpu_custom_call.1} parent=1 // pred_check_branch
      %1795 = sbr.rel (%p1793) target = $region37
    $region36: #{tpu_custom_call.1} parent=1 // pred_region
      %s1796 = sld [smem:[#allocation2]]
      %s1797 = sld [smem:[#allocation2 + $0x1]]
      %v1798 = vld [vmem:[#allocation9] sm:$0x1]
      %v1799 = vstv %s1796
      %v1800 = vmul.f32 %v1798, %v1799
      %v1801 = vstv %s1797
      %v1802 = vadd.f32 %v1800, %v1801
      %1803 = vst [vmem:[#allocation9] sm:$0x1] %v1802
    $region37: #{tpu_custom_call.1} parent=1 // pred_fallthru
      _
    // Predicated region
    $region38: #{tpu_custom_call.1} parent=1 // pred_check
      _
    $region39: #{tpu_custom_call.1} parent=1 // pred_check_branch
      %1805 = sbr.rel (0) target = $region41
    $region40: #{tpu_custom_call.1} parent=1 // pred_region
      %s1807 = ssub.s32 16, 16
      %1808 = vsyncadd [#allocation4], %s1807
      %s1810 = sshll.u32 [#allocation9], 4
      %s1811 = int_to_ptr.vmem [resolvable:$true] %s1810
      %1813 = dma.vmem_to_hbm [thread:$0]  %s1811, 16, %s3, [#allocation4]
    $region41: #{tpu_custom_call.1} parent=1 // pred_fallthru
      _
    // Predicated region
    $region42: #{tpu_custom_call.1} parent=1 // pred_check
      _
    $region43: #{tpu_custom_call.1} parent=1 // pred_check_branch
      %1815 = sbr.rel (0) target = $region45
    $region44: #{tpu_custom_call.1} parent=1 // pred_region
      %1816 = dma.done [#allocation4], 16
    $region45: #{tpu_custom_call.1} parent=1 // pred_fallthru
      _
    %1817 = vsyncpa [#allocation3], 1
    %1818 = vsyncpa [#allocation8], 1
    %1819 = vsyncpa [#allocation4], 1
    %1820 = vsyncpa [#allocation5], 1

</llo_original>
